<compile_context>
chip_gen: v5e
topology: v5e:2x2
jax: 0.10.0
libtpu: 0.0.40
codegen_flags: <defaults>
</compile_context>

<pallas_src>
import functools

import jax
import jax.numpy as jnp
from jax import lax
from jax.experimental import pallas as pl
from jax.experimental.pallas import tpu as pltpu

NEG = -1.0e30        # "minus infinity" that stays finite (avoids inf-inf = NaN)
_LANE = 128
_SUBLANE = 8
_MAX_T_TILE = 8


def _round_up(x, m):
    return ((x + m - 1) // m) * m


def _pick_t_tile(T, max_tile=_MAX_T_TILE):
    """Largest divisor of T that is <= max_tile (so no time padding is needed)."""
    for t in range(min(T, max_tile), 0, -1):
        if T % t == 0:
            return t
    return 1


def _crf_logz_kernel(emit_ref, etrans_ref, out_ref, alpha_ref, *, nt, cp, t_tile):
    """Forward algorithm (log partition) for `nt` CRFs packed along lanes.

    emit_ref  : (t_tile, Bp, nt*cp) f32  emissions for this time tile; for t>=1
                                         the per-"to"-label transition col-max is
                                         already folded in; padding = NEG.
    etrans_ref: (nt*cp, nt*cp)      f32  block-diagonal exp(trans - colmax);
                                         off-diagonal / padded entries are 0.
    out_ref   : (nt, Bp, 128)       f32  per-example logZ broadcast across lanes,
                                         written once at the last time tile.
    alpha_ref : (Bp, nt*cp)         f32  VMEM scratch carrying alpha across tiles.
    """
    tt = pl.program_id(1)
    etrans = etrans_ref[...]
    bp = alpha_ref.shape[0]

    def step(alpha, e_t):
        # Stabilized exp-matmul recursion; one independent lane-block per task.
        eas, ms = [], []
        for i in range(nt):
            a_i = alpha[:, i * cp:(i + 1) * cp]
            m_i = jnp.max(a_i, axis=-1, keepdims=True)
            ms.append(m_i)
            eas.append(jnp.exp(a_i - m_i))
        ea = eas[0] if nt == 1 else jnp.concatenate(eas, axis=-1)
        s = jnp.dot(ea, etrans, preferred_element_type=jnp.float32)
        outs = []
        for i in range(nt):
            s_i = s[:, i * cp:(i + 1) * cp]
            outs.append(jnp.log(jnp.maximum(s_i, 1e-30)) + ms[i])
        upd = outs[0] if nt == 1 else jnp.concatenate(outs, axis=-1)
        return upd + e_t

    e0 = emit_ref[0]          # only one (Bp, nt*cp) slice live per step

    @pl.when(tt == 0)
    def _():
        alpha_ref[...] = e0                       # alpha_0 = emissions[0]

    @pl.when(tt != 0)
    def _():
        alpha_ref[...] = step(alpha_ref[...], e0)  # recursion step for tile's t=0

    alpha = alpha_ref[...]
    for j in range(1, t_tile):                    # t_tile <= 8: tiny static loop
        alpha = step(alpha, emit_ref[j])          # ref-sliced per-timestep load
    alpha_ref[...] = alpha

    @pl.when(tt == pl.num_programs(1) - 1)
    def _():
        a = alpha_ref[...]
        for i in range(nt):
            a_i = a[:, i * cp:(i + 1) * cp]
            m_i = jnp.max(a_i, axis=-1, keepdims=True)
            logz = m_i + jnp.log(jnp.sum(jnp.exp(a_i - m_i), axis=-1, keepdims=True))
            out_ref[i] = jnp.broadcast_to(logz, (bp, out_ref.shape[-1]))


def _prep_task(emissions, transitions):
    """Per-task constant prep: colmax-shifted emissions + exp(trans - colmax)."""
    e = emissions.astype(jnp.float32)
    t = transitions.astype(jnp.float32)
    colmax = jnp.max(t, axis=0)                   # (C,) per-"to"-label max
    etrans = jnp.exp(t - colmax[None, :])         # (C, C), values in [0, 1]
    # Fold the +colmax correction of the stabilized recursion into the
    # emissions of timesteps >= 1 (timestep 0 has no incoming transition).
    e = e.at[:, 1:, :].add(colmax[None, None, :])
    return e, etrans


def _gold_score(emissions, labels, transitions):
    """Gold-path score via plain XLA gathers (kept out of the kernel)."""
    e = emissions.astype(jnp.float32)
    t = transitions.astype(jnp.float32)
    lab = labels.astype(jnp.int32)
    emit_g = jnp.take_along_axis(e, lab[..., None], axis=-1)[..., 0].sum(-1)
    trans_g = t[lab[:, :-1], lab[:, 1:]].sum(-1)
    return emit_g + trans_g


@functools.partial(jax.jit, static_argnames=("fuse_tasks",))
def multi_crf_nll(vn_emissions, vn_labels, vn_transitions,
                  srl_emissions, srl_labels, srl_transitions,
                  fuse_tasks=True):
    """Per-example CRF NLL for both tasks. Returns (2, B) f32 (row0=vn, row1=srl)."""
    B, T, c_vn = vn_emissions.shape
    sB, sT, c_srl = srl_emissions.shape
    assert (sB, sT) == (B, T), "vn and srl share the same pack -> same (B, T)"

    b_pad = _round_up(B, _SUBLANE)
    cp = _round_up(max(c_vn, c_srl, _LANE), _LANE)
    t_tile = _pick_t_tile(T)

    vn_e, vn_et = _prep_task(vn_emissions, vn_transitions)
    srl_e, srl_et = _prep_task(srl_emissions, srl_transitions)
    vn_e = jnp.transpose(vn_e, (1, 0, 2))         # (T, B, C): time-major stream
    srl_e = jnp.transpose(srl_e, (1, 0, 2))

    if fuse_tasks:
        # Single-TensorCore chips (v5e / v6e): both CRFs in one grid step,
        # block-diagonal transitions -> half the serial steps, fuller MXU tile.
        nt, G, l_tot = 2, 1, 2 * cp
        emit = jnp.full((1, T, b_pad, l_tot), NEG, jnp.float32)
        emit = emit.at[0, :, :B, :c_vn].set(vn_e)
        emit = emit.at[0, :, :B, cp:cp + c_srl].set(srl_e)
        etrans = jnp.zeros((1, l_tot, l_tot), jnp.float32)
        etrans = etrans.at[0, :c_vn, :c_vn].set(vn_et)
        etrans = etrans.at[0, cp:cp + c_srl, cp:cp + c_srl].set(srl_et)
    else:
        # v7x: one task per grid step; "parallel" task axis shards the two
        # CRFs across the two TensorCores.
        nt, G, l_tot = 1, 2, cp
        emit = jnp.full((2, T, b_pad, l_tot), NEG, jnp.float32)
        emit = emit.at[0, :, :B, :c_vn].set(vn_e)
        emit = emit.at[1, :, :B, :c_srl].set(srl_e)
        etrans = jnp.zeros((2, l_tot, l_tot), jnp.float32)
        etrans = etrans.at[0, :c_vn, :c_vn].set(vn_et)
        etrans = etrans.at[1, :c_srl, :c_srl].set(srl_et)

    # Explicit VMEM budget (emit/etrans/out double buffers + alpha scratch).
    est = (2 * t_tile * b_pad * l_tot * 4 + 2 * l_tot * l_tot * 4
           + 2 * 2 * b_pad * _LANE * 4 + b_pad * l_tot * 4)
    vmem_limit = int(min(max(4 * est, 16 << 20), 48 << 20))

    logz = pl.pallas_call(
        functools.partial(_crf_logz_kernel, nt=nt, cp=cp, t_tile=t_tile),
        out_shape=jax.ShapeDtypeStruct((2, b_pad, _LANE), jnp.float32),
        grid_spec=pltpu.PrefetchScalarGridSpec(
            num_scalar_prefetch=0,
            grid=(G, T // t_tile),                       # task groups x time tiles
            in_specs=[
                pl.BlockSpec((None, t_tile, b_pad, l_tot),
                             lambda g, tt: (g, tt, 0, 0)),
                pl.BlockSpec((None, l_tot, l_tot),
                             lambda g, tt: (g, 0, 0)),
            ],
            out_specs=pl.BlockSpec((nt, b_pad, _LANE), lambda g, tt: (g, 0, 0)),
            scratch_shapes=[pltpu.VMEM((b_pad, l_tot), jnp.float32)],
        ),
        compiler_params=pltpu.CompilerParams(
            dimension_semantics=("parallel", "arbitrary"),
            vmem_limit_bytes=vmem_limit),
    )(emit, etrans)

    logz = logz[:, :B, 0]                                # (2, B)
    gold = jnp.stack([_gold_score(vn_emissions, vn_labels, vn_transitions),
                      _gold_score(srl_emissions, srl_labels, srl_transitions)])
    return logz - gold


def _prefer_task_fusion():
    # v7x has 2 TensorCores per chip -> keep the tasks split on the parallel
    # grid axis there; fuse block-diagonally on single-TC v5e / v6e.
    try:
        kind = jax.devices()[0].device_kind.lower()
    except Exception:
        return True
    return "v7" not in kind


def multi_crf_loss(vn_emissions, vn_labels, vn_transitions,
                   srl_emissions, srl_labels, srl_transitions, multi_w,
                   fuse_tasks=None):
    """MultiCRFLoss.forward (both tasks active, training mode)."""
    # TODO(synk): no sequence mask (shared.v_l) is modeled; all T timesteps are
    # treated as valid, matching the fixed-length hot path of this spec.
    # TODO(synk): forward-only; a custom_vjp is needed before jax.grad works.
    if fuse_tasks is None:
        fuse_tasks = _prefer_task_fusion()
    nll = multi_crf_nll(vn_emissions, vn_labels, vn_transitions,
                        srl_emissions, srl_labels, srl_transitions,
                        fuse_tasks=fuse_tasks)
    vn_loss = jnp.sum(nll[0])
    srl_loss = jnp.sum(nll[1])
    loss = vn_loss * multi_w[0] + srl_loss * multi_w[1]
    rs = {
        "flat_vn_gold": vn_labels.reshape(-1),
        "flat_srl_gold": srl_labels.reshape(-1),
        # TODO(synk): Viterbi decode (flat_*_pred) and the host-side
        # analyze_semlink violation counting are eval-time python, omitted.
    }
    return loss, rs


# ---------------- pure-JAX reference for sanity checking ----------------
def crf_nll_ref(emissions, labels, transitions):
    B, T, C = emissions.shape

    def per_example(emit, lab):
        alpha = emit[0]

        def step(t, alpha):
            scores = alpha[:, None] + transitions
            return jax.nn.logsumexp(scores, axis=0) + emit[t]

        alpha = lax.fori_loop(1, T, step, alpha)
        log_z = jax.nn.logsumexp(alpha)
        gold = emit[jnp.arange(T), lab].sum() + transitions[lab[:-1], lab[1:]].sum()
        return log_z - gold

    return jax.vmap(per_example)(emissions.astype(jnp.float32), labels)


if __name__ == "__main__":
    key = jax.random.PRNGKey(0)
    k1, k2, k3, k4, k5, k6 = jax.random.split(key, 6)

    B, T = 2, 8            # number of predicates ("batch"), sequence length
    C_VN, C_SRL = 32, 64   # vn / srl label-set sizes

    vn_emissions = jax.random.normal(k1, (B, T, C_VN), dtype=jnp.float32)
    srl_emissions = jax.random.normal(k2, (B, T, C_SRL), dtype=jnp.float32)
    vn_labels = jax.random.randint(k3, (B, T), 0, C_VN, dtype=jnp.int32)
    srl_labels = jax.random.randint(k4, (B, T), 0, C_SRL, dtype=jnp.int32)

    # deterministic "parameters" (transition matrices of the two CRFs)
    vn_transitions = 0.1 * jax.random.normal(k5, (C_VN, C_VN), dtype=jnp.float32)
    srl_transitions = 0.1 * jax.random.normal(k6, (C_SRL, C_SRL), dtype=jnp.float32)

    # opt.multi_w = "1.0,0.5"
    multi_w = jnp.array([1.0, 0.5], dtype=jnp.float32)

    vn_ref = crf_nll_ref(vn_emissions, vn_labels, vn_transitions)
    srl_ref = crf_nll_ref(srl_emissions, srl_labels, srl_transitions)

    # check BOTH task layouts (fused = v5e/v6e path, split = v7x path)
    for fuse in (True, False):
        nll = multi_crf_nll(vn_emissions, vn_labels, vn_transitions,
                            srl_emissions, srl_labels, srl_transitions,
                            fuse_tasks=fuse)
        nll = jax.block_until_ready(nll)
        assert jnp.allclose(nll[0], vn_ref, rtol=1e-4, atol=1e-4), (fuse, nll[0], vn_ref)
        assert jnp.allclose(nll[1], srl_ref, rtol=1e-4, atol=1e-4), (fuse, nll[1], srl_ref)

    loss, rs = multi_crf_loss(vn_emissions, vn_labels, vn_transitions,
                              srl_emissions, srl_labels, srl_transitions,
                              multi_w)
    loss = jax.block_until_ready(loss)
    loss_ref = jnp.sum(vn_ref) * multi_w[0] + jnp.sum(srl_ref) * multi_w[1]
    assert jnp.allclose(loss, loss_ref, rtol=1e-4, atol=1e-4), (loss, loss_ref)

    print("KERNEL_OK")
</pallas_src>

<mosaic_0001>
module attributes {stable_mosaic.version = 11 : i64} {
  func.func @_crf_logz_kernel(%arg0: i32, %arg1: i32, %arg2: memref<1x8x8x256xf32, #tpu.memory_space<vmem>>, %arg3: memref<1x256x256xf32, #tpu.memory_space<vmem>>, %arg4: memref<2x8x128xf32, #tpu.memory_space<vmem>>, %arg5: memref<8x256xf32, #tpu.memory_space<vmem>>) attributes {dimension_semantics = [#tpu.dimension_semantics<parallel>, #tpu.dimension_semantics<arbitrary>], iteration_bounds = array<i64: 1, 1>, scalar_prefetch = 0 : i64, scratch_operands = 1 : i64, tpu.core_type = #tpu.core_type<tc>, window_params = [{transform_indices = @transform_0, window_bounds = array<i64: 1, 8, 8, 256>}, {transform_indices = @transform_1, window_bounds = array<i64: 1, 256, 256>}, {transform_indices = @transform_2, window_bounds = array<i64: 2, 8, 128>}]} {
    %c0 = arith.constant 0 : index
    %c0_0 = arith.constant 0 : index
    %c0_1 = arith.constant 0 : index
    %0 = vector.load %arg3[%c0, %c0_0, %c0_1] : memref<1x256x256xf32, #tpu.memory_space<vmem>>, vector<1x256x256xf32>
    %1 = vector.shape_cast %0 : vector<1x256x256xf32> to vector<256x256xf32>
    %c0_2 = arith.constant 0 : index
    %c0_3 = arith.constant 0 : index
    %c0_4 = arith.constant 0 : index
    %c0_5 = arith.constant 0 : index
    %2 = vector.load %arg2[%c0_2, %c0_3, %c0_4, %c0_5] : memref<1x8x8x256xf32, #tpu.memory_space<vmem>>, vector<1x1x8x256xf32>
    %3 = vector.shape_cast %2 : vector<1x1x8x256xf32> to vector<8x256xf32>
    %c0_i32 = arith.constant 0 : i32
    %4 = arith.cmpi eq, %arg1, %c0_i32 : i32
    %5 = arith.extui %4 : i1 to i32
    %c0_i32_6 = arith.constant 0 : i32
    %6 = arith.cmpi ne, %5, %c0_i32_6 : i32
    scf.if %6 {
      %c0_70 = arith.constant 0 : index
      %c0_71 = arith.constant 0 : index
      %225 = vector.load %arg5[%c0_70, %c0_71] : memref<8x256xf32, #tpu.memory_space<vmem>>, vector<8x256xf32>
      tpu.vector_store %arg5[%c0_70, %c0_71], %3 {strides = array<i32>} : memref<8x256xf32, #tpu.memory_space<vmem>>, vector<8x256xf32>,
    } else {
    }
    %c0_i32_7 = arith.constant 0 : i32
    %7 = arith.cmpi ne, %arg1, %c0_i32_7 : i32
    %8 = arith.extui %7 : i1 to i32
    %c0_i32_8 = arith.constant 0 : i32
    %9 = arith.cmpi ne, %8, %c0_i32_8 : i32
    scf.if %9 {
      %c0_70 = arith.constant 0 : index
      %c0_71 = arith.constant 0 : index
      %225 = vector.load %arg5[%c0_70, %c0_71] : memref<8x256xf32, #tpu.memory_space<vmem>>, vector<8x256xf32>
      %226 = vector.extract_strided_slice %225 {offsets = [0, 0], sizes = [8, 128], strides = [1, 1]} : vector<8x256xf32> to vector<8x128xf32>
      %cst_72 = arith.constant dense<0xFF800000> : vector<8xf32>
      %227 = vector.multi_reduction <maximumf>, %226, %cst_72 [1] : vector<8x128xf32> to vector<8xf32>
      %228 = vector.shape_cast %227 : vector<8xf32> to vector<8x1xf32>
      %229 = vector.broadcast %228 : vector<8x1xf32> to vector<8x128xf32>
      %230 = arith.subf %226, %229 : vector<8x128xf32>
      %231 = math.exp %230 : vector<8x128xf32>
      %232 = vector.extract_strided_slice %225 {offsets = [0, 128], sizes = [8, 128], strides = [1, 1]} : vector<8x256xf32> to vector<8x128xf32>
      %cst_73 = arith.constant dense<0xFF800000> : vector<8xf32>
      %233 = vector.multi_reduction <maximumf>, %232, %cst_73 [1] : vector<8x128xf32> to vector<8xf32>
      %234 = vector.shape_cast %233 : vector<8xf32> to vector<8x1xf32>
      %235 = vector.broadcast %234 : vector<8x1xf32> to vector<8x128xf32>
      %236 = arith.subf %232, %235 : vector<8x128xf32>
      %237 = math.exp %236 : vector<8x128xf32>
      %238 = tpu.concatenate %231, %237 in 1 : vector<8x128xf32>, vector<8x128xf32> -> vector<8x256xf32>
      %cst_74 = arith.constant dense<0.000000e+00> : vector<8x256xf32>
      %239 = tpu.matmul %238, %1, %cst_74 {dimension_numbers = #tpu.dot_dimension_numbers<[1], [0], [0], [1], [0, 0, 1, 1], [], []>} : vector<8x256xf32>, vector<256x256xf32>, vector<8x256xf32> -> vector<8x256xf32>
      %240 = vector.extract_strided_slice %239 {offsets = [0, 0], sizes = [8, 128], strides = [1, 1]} : vector<8x256xf32> to vector<8x128xf32>
      %cst_75 = arith.constant 1.000000e-30 : f32
      %241 = vector.broadcast %cst_75 : f32 to vector<8x128xf32>
      %242 = arith.maximumf %240, %241 : vector<8x128xf32>
      %243 = math.log %242 : vector<8x128xf32>
      %244 = vector.broadcast %228 : vector<8x1xf32> to vector<8x128xf32>
      %245 = arith.addf %243, %244 : vector<8x128xf32>
      %246 = vector.extract_strided_slice %239 {offsets = [0, 128], sizes = [8, 128], strides = [1, 1]} : vector<8x256xf32> to vector<8x128xf32>
      %cst_76 = arith.constant 1.000000e-30 : f32
      %247 = vector.broadcast %cst_76 : f32 to vector<8x128xf32>
      %248 = arith.maximumf %246, %247 : vector<8x128xf32>
      %249 = math.log %248 : vector<8x128xf32>
      %250 = vector.broadcast %234 : vector<8x1xf32> to vector<8x128xf32>
      %251 = arith.addf %249, %250 : vector<8x128xf32>
      %252 = tpu.concatenate %245, %251 in 1 : vector<8x128xf32>, vector<8x128xf32> -> vector<8x256xf32>
      %253 = arith.addf %252, %3 : vector<8x256xf32>
      %c0_77 = arith.constant 0 : index
      %c0_78 = arith.constant 0 : index
      %254 = vector.load %arg5[%c0_77, %c0_78] : memref<8x256xf32, #tpu.memory_space<vmem>>, vector<8x256xf32>
      tpu.vector_store %arg5[%c0_77, %c0_78], %253 {strides = array<i32>} : memref<8x256xf32, #tpu.memory_space<vmem>>, vector<8x256xf32>,
    } else {
    }
    %c0_9 = arith.constant 0 : index
    %c0_10 = arith.constant 0 : index
    %10 = vector.load %arg5[%c0_9, %c0_10] : memref<8x256xf32, #tpu.memory_space<vmem>>, vector<8x256xf32>
    %c0_11 = arith.constant 0 : index
    %c1 = arith.constant 1 : index
    %c0_12 = arith.constant 0 : index
    %c0_13 = arith.constant 0 : index
    %11 = vector.load %arg2[%c0_11, %c1, %c0_12, %c0_13] : memref<1x8x8x256xf32, #tpu.memory_space<vmem>>, vector<1x1x8x256xf32>
    %12 = vector.shape_cast %11 : vector<1x1x8x256xf32> to vector<8x256xf32>
    %13 = vector.extract_strided_slice %10 {offsets = [0, 0], sizes = [8, 128], strides = [1, 1]} : vector<8x256xf32> to vector<8x128xf32>
    %cst = arith.constant dense<0xFF800000> : vector<8xf32>
    %14 = vector.multi_reduction <maximumf>, %13, %cst [1] : vector<8x128xf32> to vector<8xf32>
    %15 = vector.shape_cast %14 : vector<8xf32> to vector<8x1xf32>
    %16 = vector.broadcast %15 : vector<8x1xf32> to vector<8x128xf32>
    %17 = arith.subf %13, %16 : vector<8x128xf32>
    %18 = math.exp %17 : vector<8x128xf32>
    %19 = vector.extract_strided_slice %10 {offsets = [0, 128], sizes = [8, 128], strides = [1, 1]} : vector<8x256xf32> to vector<8x128xf32>
    %cst_14 = arith.constant dense<0xFF800000> : vector<8xf32>
    %20 = vector.multi_reduction <maximumf>, %19, %cst_14 [1] : vector<8x128xf32> to vector<8xf32>
    %21 = vector.shape_cast %20 : vector<8xf32> to vector<8x1xf32>
    %22 = vector.broadcast %21 : vector<8x1xf32> to vector<8x128xf32>
    %23 = arith.subf %19, %22 : vector<8x128xf32>
    %24 = math.exp %23 : vector<8x128xf32>
    %25 = tpu.concatenate %18, %24 in 1 : vector<8x128xf32>, vector<8x128xf32> -> vector<8x256xf32>
    %cst_15 = arith.constant dense<0.000000e+00> : vector<8x256xf32>
    %26 = tpu.matmul %25, %1, %cst_15 {dimension_numbers = #tpu.dot_dimension_numbers<[1], [0], [0], [1], [0, 0, 1, 1], [], []>} : vector<8x256xf32>, vector<256x256xf32>, vector<8x256xf32> -> vector<8x256xf32>
    %27 = vector.extract_strided_slice %26 {offsets = [0, 0], sizes = [8, 128], strides = [1, 1]} : vector<8x256xf32> to vector<8x128xf32>
    %cst_16 = arith.constant 1.000000e-30 : f32
    %28 = vector.broadcast %cst_16 : f32 to vector<8x128xf32>
    %29 = arith.maximumf %27, %28 : vector<8x128xf32>
    %30 = math.log %29 : vector<8x128xf32>
    %31 = vector.broadcast %15 : vector<8x1xf32> to vector<8x128xf32>
    %32 = arith.addf %30, %31 : vector<8x128xf32>
    %33 = vector.extract_strided_slice %26 {offsets = [0, 128], sizes = [8, 128], strides = [1, 1]} : vector<8x256xf32> to vector<8x128xf32>
    %cst_17 = arith.constant 1.000000e-30 : f32
    %34 = vector.broadcast %cst_17 : f32 to vector<8x128xf32>
    %35 = arith.maximumf %33, %34 : vector<8x128xf32>
    %36 = math.log %35 : vector<8x128xf32>
    %37 = vector.broadcast %21 : vector<8x1xf32> to vector<8x128xf32>
    %38 = arith.addf %36, %37 : vector<8x128xf32>
    %39 = tpu.concatenate %32, %38 in 1 : vector<8x128xf32>, vector<8x128xf32> -> vector<8x256xf32>
    %40 = arith.addf %39, %12 : vector<8x256xf32>
    %c0_18 = arith.constant 0 : index
    %c2 = arith.constant 2 : index
    %c0_19 = arith.constant 0 : index
    %c0_20 = arith.constant 0 : index
    %41 = vector.load %arg2[%c0_18, %c2, %c0_19, %c0_20] : memref<1x8x8x256xf32, #tpu.memory_space<vmem>>, vector<1x1x8x256xf32>
    %42 = vector.shape_cast %41 : vector<1x1x8x256xf32> to vector<8x256xf32>
    %43 = vector.extract_strided_slice %40 {offsets = [0, 0], sizes = [8, 128], strides = [1, 1]} : vector<8x256xf32> to vector<8x128xf32>
    %cst_21 = arith.constant dense<0xFF800000> : vector<8xf32>
    %44 = vector.multi_reduction <maximumf>, %43, %cst_21 [1] : vector<8x128xf32> to vector<8xf32>
    %45 = vector.shape_cast %44 : vector<8xf32> to vector<8x1xf32>
    %46 = vector.broadcast %45 : vector<8x1xf32> to vector<8x128xf32>
    %47 = arith.subf %43, %46 : vector<8x128xf32>
    %48 = math.exp %47 : vector<8x128xf32>
    %49 = vector.extract_strided_slice %40 {offsets = [0, 128], sizes = [8, 128], strides = [1, 1]} : vector<8x256xf32> to vector<8x128xf32>
    %cst_22 = arith.constant dense<0xFF800000> : vector<8xf32>
    %50 = vector.multi_reduction <maximumf>, %49, %cst_22 [1] : vector<8x128xf32> to vector<8xf32>
    %51 = vector.shape_cast %50 : vector<8xf32> to vector<8x1xf32>
    %52 = vector.broadcast %51 : vector<8x1xf32> to vector<8x128xf32>
    %53 = arith.subf %49, %52 : vector<8x128xf32>
    %54 = math.exp %53 : vector<8x128xf32>
    %55 = tpu.concatenate %48, %54 in 1 : vector<8x128xf32>, vector<8x128xf32> -> vector<8x256xf32>
    %cst_23 = arith.constant dense<0.000000e+00> : vector<8x256xf32>
    %56 = tpu.matmul %55, %1, %cst_23 {dimension_numbers = #tpu.dot_dimension_numbers<[1], [0], [0], [1], [0, 0, 1, 1], [], []>} : vector<8x256xf32>, vector<256x256xf32>, vector<8x256xf32> -> vector<8x256xf32>
    %57 = vector.extract_strided_slice %56 {offsets = [0, 0], sizes = [8, 128], strides = [1, 1]} : vector<8x256xf32> to vector<8x128xf32>
    %cst_24 = arith.constant 1.000000e-30 : f32
    %58 = vector.broadcast %cst_24 : f32 to vector<8x128xf32>
    %59 = arith.maximumf %57, %58 : vector<8x128xf32>
    %60 = math.log %59 : vector<8x128xf32>
    %61 = vector.broadcast %45 : vector<8x1xf32> to vector<8x128xf32>
    %62 = arith.addf %60, %61 : vector<8x128xf32>
    %63 = vector.extract_strided_slice %56 {offsets = [0, 128], sizes = [8, 128], strides = [1, 1]} : vector<8x256xf32> to vector<8x128xf32>
    %cst_25 = arith.constant 1.000000e-30 : f32
    %64 = vector.broadcast %cst_25 : f32 to vector<8x128xf32>
    %65 = arith.maximumf %63, %64 : vector<8x128xf32>
    %66 = math.log %65 : vector<8x128xf32>
    %67 = vector.broadcast %51 : vector<8x1xf32> to vector<8x128xf32>
    %68 = arith.addf %66, %67 : vector<8x128xf32>
    %69 = tpu.concatenate %62, %68 in 1 : vector<8x128xf32>, vector<8x128xf32> -> vector<8x256xf32>
    %70 = arith.addf %69, %42 : vector<8x256xf32>
    %c0_26 = arith.constant 0 : index
    %c3 = arith.constant 3 : index
    %c0_27 = arith.constant 0 : index
    %c0_28 = arith.constant 0 : index
    %71 = vector.load %arg2[%c0_26, %c3, %c0_27, %c0_28] : memref<1x8x8x256xf32, #tpu.memory_space<vmem>>, vector<1x1x8x256xf32>
    %72 = vector.shape_cast %71 : vector<1x1x8x256xf32> to vector<8x256xf32>
    %73 = vector.extract_strided_slice %70 {offsets = [0, 0], sizes = [8, 128], strides = [1, 1]} : vector<8x256xf32> to vector<8x128xf32>
    %cst_29 = arith.constant dense<0xFF800000> : vector<8xf32>
    %74 = vector.multi_reduction <maximumf>, %73, %cst_29 [1] : vector<8x128xf32> to vector<8xf32>
    %75 = vector.shape_cast %74 : vector<8xf32> to vector<8x1xf32>
    %76 = vector.broadcast %75 : vector<8x1xf32> to vector<8x128xf32>
    %77 = arith.subf %73, %76 : vector<8x128xf32>
    %78 = math.exp %77 : vector<8x128xf32>
    %79 = vector.extract_strided_slice %70 {offsets = [0, 128], sizes = [8, 128], strides = [1, 1]} : vector<8x256xf32> to vector<8x128xf32>
    %cst_30 = arith.constant dense<0xFF800000> : vector<8xf32>
    %80 = vector.multi_reduction <maximumf>, %79, %cst_30 [1] : vector<8x128xf32> to vector<8xf32>
    %81 = vector.shape_cast %80 : vector<8xf32> to vector<8x1xf32>
    %82 = vector.broadcast %81 : vector<8x1xf32> to vector<8x128xf32>
    %83 = arith.subf %79, %82 : vector<8x128xf32>
    %84 = math.exp %83 : vector<8x128xf32>
    %85 = tpu.concatenate %78, %84 in 1 : vector<8x128xf32>, vector<8x128xf32> -> vector<8x256xf32>
    %cst_31 = arith.constant dense<0.000000e+00> : vector<8x256xf32>
    %86 = tpu.matmul %85, %1, %cst_31 {dimension_numbers = #tpu.dot_dimension_numbers<[1], [0], [0], [1], [0, 0, 1, 1], [], []>} : vector<8x256xf32>, vector<256x256xf32>, vector<8x256xf32> -> vector<8x256xf32>
    %87 = vector.extract_strided_slice %86 {offsets = [0, 0], sizes = [8, 128], strides = [1, 1]} : vector<8x256xf32> to vector<8x128xf32>
    %cst_32 = arith.constant 1.000000e-30 : f32
    %88 = vector.broadcast %cst_32 : f32 to vector<8x128xf32>
    %89 = arith.maximumf %87, %88 : vector<8x128xf32>
    %90 = math.log %89 : vector<8x128xf32>
    %91 = vector.broadcast %75 : vector<8x1xf32> to vector<8x128xf32>
    %92 = arith.addf %90, %91 : vector<8x128xf32>
    %93 = vector.extract_strided_slice %86 {offsets = [0, 128], sizes = [8, 128], strides = [1, 1]} : vector<8x256xf32> to vector<8x128xf32>
    %cst_33 = arith.constant 1.000000e-30 : f32
    %94 = vector.broadcast %cst_33 : f32 to vector<8x128xf32>
    %95 = arith.maximumf %93, %94 : vector<8x128xf32>
    %96 = math.log %95 : vector<8x128xf32>
    %97 = vector.broadcast %81 : vector<8x1xf32> to vector<8x128xf32>
    %98 = arith.addf %96, %97 : vector<8x128xf32>
    %99 = tpu.concatenate %92, %98 in 1 : vector<8x128xf32>, vector<8x128xf32> -> vector<8x256xf32>
    %100 = arith.addf %99, %72 : vector<8x256xf32>
    %c0_34 = arith.constant 0 : index
    %c4 = arith.constant 4 : index
    %c0_35 = arith.constant 0 : index
    %c0_36 = arith.constant 0 : index
    %101 = vector.load %arg2[%c0_34, %c4, %c0_35, %c0_36] : memref<1x8x8x256xf32, #tpu.memory_space<vmem>>, vector<1x1x8x256xf32>
    %102 = vector.shape_cast %101 : vector<1x1x8x256xf32> to vector<8x256xf32>
    %103 = vector.extract_strided_slice %100 {offsets = [0, 0], sizes = [8, 128], strides = [1, 1]} : vector<8x256xf32> to vector<8x128xf32>
    %cst_37 = arith.constant dense<0xFF800000> : vector<8xf32>
    %104 = vector.multi_reduction <maximumf>, %103, %cst_37 [1] : vector<8x128xf32> to vector<8xf32>
    %105 = vector.shape_cast %104 : vector<8xf32> to vector<8x1xf32>
    %106 = vector.broadcast %105 : vector<8x1xf32> to vector<8x128xf32>
    %107 = arith.subf %103, %106 : vector<8x128xf32>
    %108 = math.exp %107 : vector<8x128xf32>
    %109 = vector.extract_strided_slice %100 {offsets = [0, 128], sizes = [8, 128], strides = [1, 1]} : vector<8x256xf32> to vector<8x128xf32>
    %cst_38 = arith.constant dense<0xFF800000> : vector<8xf32>
    %110 = vector.multi_reduction <maximumf>, %109, %cst_38 [1] : vector<8x128xf32> to vector<8xf32>
    %111 = vector.shape_cast %110 : vector<8xf32> to vector<8x1xf32>
    %112 = vector.broadcast %111 : vector<8x1xf32> to vector<8x128xf32>
    %113 = arith.subf %109, %112 : vector<8x128xf32>
    %114 = math.exp %113 : vector<8x128xf32>
    %115 = tpu.concatenate %108, %114 in 1 : vector<8x128xf32>, vector<8x128xf32> -> vector<8x256xf32>
    %cst_39 = arith.constant dense<0.000000e+00> : vector<8x256xf32>
    %116 = tpu.matmul %115, %1, %cst_39 {dimension_numbers = #tpu.dot_dimension_numbers<[1], [0], [0], [1], [0, 0, 1, 1], [], []>} : vector<8x256xf32>, vector<256x256xf32>, vector<8x256xf32> -> vector<8x256xf32>
    %117 = vector.extract_strided_slice %116 {offsets = [0, 0], sizes = [8, 128], strides = [1, 1]} : vector<8x256xf32> to vector<8x128xf32>
    %cst_40 = arith.constant 1.000000e-30 : f32
    %118 = vector.broadcast %cst_40 : f32 to vector<8x128xf32>
    %119 = arith.maximumf %117, %118 : vector<8x128xf32>
    %120 = math.log %119 : vector<8x128xf32>
    %121 = vector.broadcast %105 : vector<8x1xf32> to vector<8x128xf32>
    %122 = arith.addf %120, %121 : vector<8x128xf32>
    %123 = vector.extract_strided_slice %116 {offsets = [0, 128], sizes = [8, 128], strides = [1, 1]} : vector<8x256xf32> to vector<8x128xf32>
    %cst_41 = arith.constant 1.000000e-30 : f32
    %124 = vector.broadcast %cst_41 : f32 to vector<8x128xf32>
    %125 = arith.maximumf %123, %124 : vector<8x128xf32>
    %126 = math.log %125 : vector<8x128xf32>
    %127 = vector.broadcast %111 : vector<8x1xf32> to vector<8x128xf32>
    %128 = arith.addf %126, %127 : vector<8x128xf32>
    %129 = tpu.concatenate %122, %128 in 1 : vector<8x128xf32>, vector<8x128xf32> -> vector<8x256xf32>
    %130 = arith.addf %129, %102 : vector<8x256xf32>
    %c0_42 = arith.constant 0 : index
    %c5 = arith.constant 5 : index
    %c0_43 = arith.constant 0 : index
    %c0_44 = arith.constant 0 : index
    %131 = vector.load %arg2[%c0_42, %c5, %c0_43, %c0_44] : memref<1x8x8x256xf32, #tpu.memory_space<vmem>>, vector<1x1x8x256xf32>
    %132 = vector.shape_cast %131 : vector<1x1x8x256xf32> to vector<8x256xf32>
    %133 = vector.extract_strided_slice %130 {offsets = [0, 0], sizes = [8, 128], strides = [1, 1]} : vector<8x256xf32> to vector<8x128xf32>
    %cst_45 = arith.constant dense<0xFF800000> : vector<8xf32>
    %134 = vector.multi_reduction <maximumf>, %133, %cst_45 [1] : vector<8x128xf32> to vector<8xf32>
    %135 = vector.shape_cast %134 : vector<8xf32> to vector<8x1xf32>
    %136 = vector.broadcast %135 : vector<8x1xf32> to vector<8x128xf32>
    %137 = arith.subf %133, %136 : vector<8x128xf32>
    %138 = math.exp %137 : vector<8x128xf32>
    %139 = vector.extract_strided_slice %130 {offsets = [0, 128], sizes = [8, 128], strides = [1, 1]} : vector<8x256xf32> to vector<8x128xf32>
    %cst_46 = arith.constant dense<0xFF800000> : vector<8xf32>
    %140 = vector.multi_reduction <maximumf>, %139, %cst_46 [1] : vector<8x128xf32> to vector<8xf32>
    %141 = vector.shape_cast %140 : vector<8xf32> to vector<8x1xf32>
    %142 = vector.broadcast %141 : vector<8x1xf32> to vector<8x128xf32>
    %143 = arith.subf %139, %142 : vector<8x128xf32>
    %144 = math.exp %143 : vector<8x128xf32>
    %145 = tpu.concatenate %138, %144 in 1 : vector<8x128xf32>, vector<8x128xf32> -> vector<8x256xf32>
    %cst_47 = arith.constant dense<0.000000e+00> : vector<8x256xf32>
    %146 = tpu.matmul %145, %1, %cst_47 {dimension_numbers = #tpu.dot_dimension_numbers<[1], [0], [0], [1], [0, 0, 1, 1], [], []>} : vector<8x256xf32>, vector<256x256xf32>, vector<8x256xf32> -> vector<8x256xf32>
    %147 = vector.extract_strided_slice %146 {offsets = [0, 0], sizes = [8, 128], strides = [1, 1]} : vector<8x256xf32> to vector<8x128xf32>
    %cst_48 = arith.constant 1.000000e-30 : f32
    %148 = vector.broadcast %cst_48 : f32 to vector<8x128xf32>
    %149 = arith.maximumf %147, %148 : vector<8x128xf32>
    %150 = math.log %149 : vector<8x128xf32>
    %151 = vector.broadcast %135 : vector<8x1xf32> to vector<8x128xf32>
    %152 = arith.addf %150, %151 : vector<8x128xf32>
    %153 = vector.extract_strided_slice %146 {offsets = [0, 128], sizes = [8, 128], strides = [1, 1]} : vector<8x256xf32> to vector<8x128xf32>
    %cst_49 = arith.constant 1.000000e-30 : f32
    %154 = vector.broadcast %cst_49 : f32 to vector<8x128xf32>
    %155 = arith.maximumf %153, %154 : vector<8x128xf32>
    %156 = math.log %155 : vector<8x128xf32>
    %157 = vector.broadcast %141 : vector<8x1xf32> to vector<8x128xf32>
    %158 = arith.addf %156, %157 : vector<8x128xf32>
    %159 = tpu.concatenate %152, %158 in 1 : vector<8x128xf32>, vector<8x128xf32> -> vector<8x256xf32>
    %160 = arith.addf %159, %132 : vector<8x256xf32>
    %c0_50 = arith.constant 0 : index
    %c6 = arith.constant 6 : index
    %c0_51 = arith.constant 0 : index
    %c0_52 = arith.constant 0 : index
    %161 = vector.load %arg2[%c0_50, %c6, %c0_51, %c0_52] : memref<1x8x8x256xf32, #tpu.memory_space<vmem>>, vector<1x1x8x256xf32>
    %162 = vector.shape_cast %161 : vector<1x1x8x256xf32> to vector<8x256xf32>
    %163 = vector.extract_strided_slice %160 {offsets = [0, 0], sizes = [8, 128], strides = [1, 1]} : vector<8x256xf32> to vector<8x128xf32>
    %cst_53 = arith.constant dense<0xFF800000> : vector<8xf32>
    %164 = vector.multi_reduction <maximumf>, %163, %cst_53 [1] : vector<8x128xf32> to vector<8xf32>
    %165 = vector.shape_cast %164 : vector<8xf32> to vector<8x1xf32>
    %166 = vector.broadcast %165 : vector<8x1xf32> to vector<8x128xf32>
    %167 = arith.subf %163, %166 : vector<8x128xf32>
    %168 = math.exp %167 : vector<8x128xf32>
    %169 = vector.extract_strided_slice %160 {offsets = [0, 128], sizes = [8, 128], strides = [1, 1]} : vector<8x256xf32> to vector<8x128xf32>
    %cst_54 = arith.constant dense<0xFF800000> : vector<8xf32>
    %170 = vector.multi_reduction <maximumf>, %169, %cst_54 [1] : vector<8x128xf32> to vector<8xf32>
    %171 = vector.shape_cast %170 : vector<8xf32> to vector<8x1xf32>
    %172 = vector.broadcast %171 : vector<8x1xf32> to vector<8x128xf32>
    %173 = arith.subf %169, %172 : vector<8x128xf32>
    %174 = math.exp %173 : vector<8x128xf32>
    %175 = tpu.concatenate %168, %174 in 1 : vector<8x128xf32>, vector<8x128xf32> -> vector<8x256xf32>
    %cst_55 = arith.constant dense<0.000000e+00> : vector<8x256xf32>
    %176 = tpu.matmul %175, %1, %cst_55 {dimension_numbers = #tpu.dot_dimension_numbers<[1], [0], [0], [1], [0, 0, 1, 1], [], []>} : vector<8x256xf32>, vector<256x256xf32>, vector<8x256xf32> -> vector<8x256xf32>
    %177 = vector.extract_strided_slice %176 {offsets = [0, 0], sizes = [8, 128], strides = [1, 1]} : vector<8x256xf32> to vector<8x128xf32>
    %cst_56 = arith.constant 1.000000e-30 : f32
    %178 = vector.broadcast %cst_56 : f32 to vector<8x128xf32>
    %179 = arith.maximumf %177, %178 : vector<8x128xf32>
    %180 = math.log %179 : vector<8x128xf32>
    %181 = vector.broadcast %165 : vector<8x1xf32> to vector<8x128xf32>
    %182 = arith.addf %180, %181 : vector<8x128xf32>
    %183 = vector.extract_strided_slice %176 {offsets = [0, 128], sizes = [8, 128], strides = [1, 1]} : vector<8x256xf32> to vector<8x128xf32>
    %cst_57 = arith.constant 1.000000e-30 : f32
    %184 = vector.broadcast %cst_57 : f32 to vector<8x128xf32>
    %185 = arith.maximumf %183, %184 : vector<8x128xf32>
    %186 = math.log %185 : vector<8x128xf32>
    %187 = vector.broadcast %171 : vector<8x1xf32> to vector<8x128xf32>
    %188 = arith.addf %186, %187 : vector<8x128xf32>
    %189 = tpu.concatenate %182, %188 in 1 : vector<8x128xf32>, vector<8x128xf32> -> vector<8x256xf32>
    %190 = arith.addf %189, %162 : vector<8x256xf32>
    %c0_58 = arith.constant 0 : index
    %c7 = arith.constant 7 : index
    %c0_59 = arith.constant 0 : index
    %c0_60 = arith.constant 0 : index
    %191 = vector.load %arg2[%c0_58, %c7, %c0_59, %c0_60] : memref<1x8x8x256xf32, #tpu.memory_space<vmem>>, vector<1x1x8x256xf32>
    %192 = vector.shape_cast %191 : vector<1x1x8x256xf32> to vector<8x256xf32>
    %193 = vector.extract_strided_slice %190 {offsets = [0, 0], sizes = [8, 128], strides = [1, 1]} : vector<8x256xf32> to vector<8x128xf32>
    %cst_61 = arith.constant dense<0xFF800000> : vector<8xf32>
    %194 = vector.multi_reduction <maximumf>, %193, %cst_61 [1] : vector<8x128xf32> to vector<8xf32>
    %195 = vector.shape_cast %194 : vector<8xf32> to vector<8x1xf32>
    %196 = vector.broadcast %195 : vector<8x1xf32> to vector<8x128xf32>
    %197 = arith.subf %193, %196 : vector<8x128xf32>
    %198 = math.exp %197 : vector<8x128xf32>
    %199 = vector.extract_strided_slice %190 {offsets = [0, 128], sizes = [8, 128], strides = [1, 1]} : vector<8x256xf32> to vector<8x128xf32>
    %cst_62 = arith.constant dense<0xFF800000> : vector<8xf32>
    %200 = vector.multi_reduction <maximumf>, %199, %cst_62 [1] : vector<8x128xf32> to vector<8xf32>
    %201 = vector.shape_cast %200 : vector<8xf32> to vector<8x1xf32>
    %202 = vector.broadcast %201 : vector<8x1xf32> to vector<8x128xf32>
    %203 = arith.subf %199, %202 : vector<8x128xf32>
    %204 = math.exp %203 : vector<8x128xf32>
    %205 = tpu.concatenate %198, %204 in 1 : vector<8x128xf32>, vector<8x128xf32> -> vector<8x256xf32>
    %cst_63 = arith.constant dense<0.000000e+00> : vector<8x256xf32>
    %206 = tpu.matmul %205, %1, %cst_63 {dimension_numbers = #tpu.dot_dimension_numbers<[1], [0], [0], [1], [0, 0, 1, 1], [], []>} : vector<8x256xf32>, vector<256x256xf32>, vector<8x256xf32> -> vector<8x256xf32>
    %207 = vector.extract_strided_slice %206 {offsets = [0, 0], sizes = [8, 128], strides = [1, 1]} : vector<8x256xf32> to vector<8x128xf32>
    %cst_64 = arith.constant 1.000000e-30 : f32
    %208 = vector.broadcast %cst_64 : f32 to vector<8x128xf32>
    %209 = arith.maximumf %207, %208 : vector<8x128xf32>
    %210 = math.log %209 : vector<8x128xf32>
    %211 = vector.broadcast %195 : vector<8x1xf32> to vector<8x128xf32>
    %212 = arith.addf %210, %211 : vector<8x128xf32>
    %213 = vector.extract_strided_slice %206 {offsets = [0, 128], sizes = [8, 128], strides = [1, 1]} : vector<8x256xf32> to vector<8x128xf32>
    %cst_65 = arith.constant 1.000000e-30 : f32
    %214 = vector.broadcast %cst_65 : f32 to vector<8x128xf32>
    %215 = arith.maximumf %213, %214 : vector<8x128xf32>
    %216 = math.log %215 : vector<8x128xf32>
    %217 = vector.broadcast %201 : vector<8x1xf32> to vector<8x128xf32>
    %218 = arith.addf %216, %217 : vector<8x128xf32>
    %219 = tpu.concatenate %212, %218 in 1 : vector<8x128xf32>, vector<8x128xf32> -> vector<8x256xf32>
    %220 = arith.addf %219, %192 : vector<8x256xf32>
    %c0_66 = arith.constant 0 : index
    %c0_67 = arith.constant 0 : index
    %221 = vector.load %arg5[%c0_66, %c0_67] : memref<8x256xf32, #tpu.memory_space<vmem>>, vector<8x256xf32>
    tpu.vector_store %arg5[%c0_66, %c0_67], %220 {strides = array<i32>} : memref<8x256xf32, #tpu.memory_space<vmem>>, vector<8x256xf32>,
    %c0_i32_68 = arith.constant 0 : i32
    %222 = arith.cmpi eq, %arg1, %c0_i32_68 : i32
    %223 = arith.extui %222 : i1 to i32
    %c0_i32_69 = arith.constant 0 : i32
    %224 = arith.cmpi ne, %223, %c0_i32_69 : i32
    scf.if %224 {
      %c0_70 = arith.constant 0 : index
      %c0_71 = arith.constant 0 : index
      %225 = vector.load %arg5[%c0_70, %c0_71] : memref<8x256xf32, #tpu.memory_space<vmem>>, vector<8x256xf32>
      %226 = vector.extract_strided_slice %225 {offsets = [0, 0], sizes = [8, 128], strides = [1, 1]} : vector<8x256xf32> to vector<8x128xf32>
      %cst_72 = arith.constant dense<0xFF800000> : vector<8xf32>
      %227 = vector.multi_reduction <maximumf>, %226, %cst_72 [1] : vector<8x128xf32> to vector<8xf32>
      %228 = vector.shape_cast %227 : vector<8xf32> to vector<8x1xf32>
      %229 = vector.broadcast %228 : vector<8x1xf32> to vector<8x128xf32>
      %230 = arith.subf %226, %229 : vector<8x128xf32>
      %231 = math.exp %230 : vector<8x128xf32>
      %cst_73 = arith.constant dense<0.000000e+00> : vector<8xf32>
      %232 = vector.multi_reduction <add>, %231, %cst_73 [1] : vector<8x128xf32> to vector<8xf32>
      %233 = vector.shape_cast %232 : vector<8xf32> to vector<8x1xf32>
      %234 = math.log %233 : vector<8x1xf32>
      %235 = arith.addf %228, %234 : vector<8x1xf32>
      %236 = vector.shape_cast %235 : vector<8x1xf32> to vector<8x1xf32>
      %237 = vector.broadcast %236 : vector<8x1xf32> to vector<8x128xf32>
      %c0_74 = arith.constant 0 : index
      %c0_75 = arith.constant 0 : index
      %c0_76 = arith.constant 0 : index
      %238 = vector.load %arg4[%c0_74, %c0_75, %c0_76] : memref<2x8x128xf32, #tpu.memory_space<vmem>>, vector<1x8x128xf32>
      %239 = vector.shape_cast %238 : vector<1x8x128xf32> to vector<8x128xf32>
      %240 = vector.shape_cast %237 : vector<8x128xf32> to vector<1x8x128xf32>
      tpu.vector_store %arg4[%c0_74, %c0_75, %c0_76], %240 {strides = array<i32>} : memref<2x8x128xf32, #tpu.memory_space<vmem>>, vector<1x8x128xf32>,
      %241 = vector.extract_strided_slice %225 {offsets = [0, 128], sizes = [8, 128], strides = [1, 1]} : vector<8x256xf32> to vector<8x128xf32>
      %cst_77 = arith.constant dense<0xFF800000> : vector<8xf32>
      %242 = vector.multi_reduction <maximumf>, %241, %cst_77 [1] : vector<8x128xf32> to vector<8xf32>
      %243 = vector.shape_cast %242 : vector<8xf32> to vector<8x1xf32>
      %244 = vector.broadcast %243 : vector<8x1xf32> to vector<8x128xf32>
      %245 = arith.subf %241, %244 : vector<8x128xf32>
      %246 = math.exp %245 : vector<8x128xf32>
      %cst_78 = arith.constant dense<0.000000e+00> : vector<8xf32>
      %247 = vector.multi_reduction <add>, %246, %cst_78 [1] : vector<8x128xf32> to vector<8xf32>
      %248 = vector.shape_cast %247 : vector<8xf32> to vector<8x1xf32>
      %249 = math.log %248 : vector<8x1xf32>
      %250 = arith.addf %243, %249 : vector<8x1xf32>
      %251 = vector.shape_cast %250 : vector<8x1xf32> to vector<8x1xf32>
      %252 = vector.broadcast %251 : vector<8x1xf32> to vector<8x128xf32>
      %c1_79 = arith.constant 1 : index
      %c0_80 = arith.constant 0 : index
      %c0_81 = arith.constant 0 : index
      %253 = vector.load %arg4[%c1_79, %c0_80, %c0_81] : memref<2x8x128xf32, #tpu.memory_space<vmem>>, vector<1x8x128xf32>
      %254 = vector.shape_cast %253 : vector<1x8x128xf32> to vector<8x128xf32>
      %255 = vector.shape_cast %252 : vector<8x128xf32> to vector<1x8x128xf32>
      tpu.vector_store %arg4[%c1_79, %c0_80, %c0_81], %255 {strides = array<i32>} : memref<2x8x128xf32, #tpu.memory_space<vmem>>, vector<1x8x128xf32>,
    } else {
    }
    return
  }
  func.func @transform_0(%arg0: i32, %arg1: i32) -> (i32, i32, i32, i32) {
    %c0_i32 = arith.constant 0 : i32
    %c0_i32_0 = arith.constant 0 : i32
    %c0_i32_1 = arith.constant 0 : i32
    return %arg0, %arg1, %c0_i32, %c0_i32_0 : i32, i32, i32, i32
  }
  func.func @transform_1(%arg0: i32, %arg1: i32) -> (i32, i32, i32) {
    %c0_i32 = arith.constant 0 : i32
    %c0_i32_0 = arith.constant 0 : i32
    %c0_i32_1 = arith.constant 0 : i32
    return %arg0, %c0_i32, %c0_i32_0 : i32, i32, i32
  }
  func.func @transform_2(%arg0: i32, %arg1: i32) -> (i32, i32, i32) {
    %c0_i32 = arith.constant 0 : i32
    %c0_i32_0 = arith.constant 0 : i32
    %c0_i32_1 = arith.constant 0 : i32
    return %arg0, %c0_i32, %c0_i32_0 : i32, i32, i32
  }
}

</mosaic_0001>

<llo_original>
// kernel: multi_crf_nll.1
$region0: #{multi_crf_nll.1}
  #allocation0 [shape = 'u32[]', space=smem, size = 0x4, offset = 0x4, fixed_abs, tag = 'smem constant byte address 0x4 - core index']
  #allocation1 [shape = 'u32[72,128]{1,0:T(1,128)}', space=vmem, size = 0x9000, scoped, tag = 'internal scratch']
  #allocation2 [shape = 'f32[8,256]{1,0:T(8,128)}', space=vmem, size = 0x2000, scoped, tag = 'scratch operand']
  %s0 = inlined_call_operand.vmem [shape: f32[1,8,8,256], index: 0, kind: input, shape index: {}]
  %s1 = inlined_call_operand.vmem [shape: f32[1,256,256], index: 1, kind: input, shape index: {}]
  %s2 = inlined_call_operand.vmem [shape: f32[2,8,128], index: 2, kind: output, shape index: {}]
  %s3 = sld [smem:[#allocation0]]
  $region30: #{multi_crf_nll.1} parent=0
    _
  %s5 = ssub.s32 1, %s3
  %s6 = scalar_select 0, %s5, %s3
  // Predicated region
  $region2: #{multi_crf_nll.1} parent=0 // pred_check
    _
  $region3: #{multi_crf_nll.1} parent=0 // pred_check_branch
    %8 = sbr.rel (0) target = $region5
  $region4: #{multi_crf_nll.1} parent=0 // pred_region
    _
  $region5: #{multi_crf_nll.1} parent=0 // pred_fallthru
    _
  // Predicated region
  $region6: #{multi_crf_nll.1} parent=0 // pred_check
    _
  $region7: #{multi_crf_nll.1} parent=0 // pred_check_branch
    %10 = sbr.rel (0) target = $region9
  $region8: #{multi_crf_nll.1} parent=0 // pred_region
    _
  $region9: #{multi_crf_nll.1} parent=0 // pred_fallthru
    _
  %v11 = vld [vmem:[%s1] sm:$0xff]
  %v12 = vld [vmem:[%s1 + $0x8] sm:$0xff]
  %v13 = vld [vmem:[%s1 + $0x10] sm:$0xff]
  %v14 = vld [vmem:[%s1 + $0x18] sm:$0xff]
  %v15 = vld [vmem:[%s1 + $0x20] sm:$0xff]
  %v16 = vld [vmem:[%s1 + $0x28] sm:$0xff]
  %v17 = vld [vmem:[%s1 + $0x30] sm:$0xff]
  %v18 = vld [vmem:[%s1 + $0x38] sm:$0xff]
  %v19 = vld [vmem:[%s1 + $0x40] sm:$0xff]
  %v20 = vld [vmem:[%s1 + $0x48] sm:$0xff]
  %v21 = vld [vmem:[%s1 + $0x50] sm:$0xff]
  %v22 = vld [vmem:[%s1 + $0x58] sm:$0xff]
  %v23 = vld [vmem:[%s1 + $0x60] sm:$0xff]
  %v24 = vld [vmem:[%s1 + $0x68] sm:$0xff]
  %v25 = vld [vmem:[%s1 + $0x70] sm:$0xff]
  %v26 = vld [vmem:[%s1 + $0x78] sm:$0xff]
  %v27 = vld [vmem:[%s1 + $0x80] sm:$0xff]
  %v28 = vld [vmem:[%s1 + $0x88] sm:$0xff]
  %v29 = vld [vmem:[%s1 + $0x90] sm:$0xff]
  %v30 = vld [vmem:[%s1 + $0x98] sm:$0xff]
  %v31 = vld [vmem:[%s1 + $0xa0] sm:$0xff]
  %v32 = vld [vmem:[%s1 + $0xa8] sm:$0xff]
  %v33 = vld [vmem:[%s1 + $0xb0] sm:$0xff]
  %v34 = vld [vmem:[%s1 + $0xb8] sm:$0xff]
  %v35 = vld [vmem:[%s1 + $0xc0] sm:$0xff]
  %v36 = vld [vmem:[%s1 + $0xc8] sm:$0xff]
  %v37 = vld [vmem:[%s1 + $0xd0] sm:$0xff]
  %v38 = vld [vmem:[%s1 + $0xd8] sm:$0xff]
  %v39 = vld [vmem:[%s1 + $0xe0] sm:$0xff]
  %v40 = vld [vmem:[%s1 + $0xe8] sm:$0xff]
  %v41 = vld [vmem:[%s1 + $0xf0] sm:$0xff]
  %v42 = vld [vmem:[%s1 + $0xf8] sm:$0xff]
  %v43 = vld [vmem:[%s1 + $0x100] sm:$0xff]
  %v44 = vld [vmem:[%s1 + $0x108] sm:$0xff]
  %v45 = vld [vmem:[%s1 + $0x110] sm:$0xff]
  %v46 = vld [vmem:[%s1 + $0x118] sm:$0xff]
  %v47 = vld [vmem:[%s1 + $0x120] sm:$0xff]
  %v48 = vld [vmem:[%s1 + $0x128] sm:$0xff]
  %v49 = vld [vmem:[%s1 + $0x130] sm:$0xff]
  %v50 = vld [vmem:[%s1 + $0x138] sm:$0xff]
  %v51 = vld [vmem:[%s1 + $0x140] sm:$0xff]
  %v52 = vld [vmem:[%s1 + $0x148] sm:$0xff]
  %v53 = vld [vmem:[%s1 + $0x150] sm:$0xff]
  %v54 = vld [vmem:[%s1 + $0x158] sm:$0xff]
  %v55 = vld [vmem:[%s1 + $0x160] sm:$0xff]
  %v56 = vld [vmem:[%s1 + $0x168] sm:$0xff]
  %v57 = vld [vmem:[%s1 + $0x170] sm:$0xff]
  %v58 = vld [vmem:[%s1 + $0x178] sm:$0xff]
  %v59 = vld [vmem:[%s1 + $0x180] sm:$0xff]
  %v60 = vld [vmem:[%s1 + $0x188] sm:$0xff]
  %v61 = vld [vmem:[%s1 + $0x190] sm:$0xff]
  %v62 = vld [vmem:[%s1 + $0x198] sm:$0xff]
  %v63 = vld [vmem:[%s1 + $0x1a0] sm:$0xff]
  %v64 = vld [vmem:[%s1 + $0x1a8] sm:$0xff]
  %v65 = vld [vmem:[%s1 + $0x1b0] sm:$0xff]
  %v66 = vld [vmem:[%s1 + $0x1b8] sm:$0xff]
  %v67 = vld [vmem:[%s1 + $0x1c0] sm:$0xff]
  %v68 = vld [vmem:[%s1 + $0x1c8] sm:$0xff]
  %v69 = vld [vmem:[%s1 + $0x1d0] sm:$0xff]
  %v70 = vld [vmem:[%s1 + $0x1d8] sm:$0xff]
  %v71 = vld [vmem:[%s1 + $0x1e0] sm:$0xff]
  %v72 = vld [vmem:[%s1 + $0x1e8] sm:$0xff]
  %v73 = vld [vmem:[%s1 + $0x1f0] sm:$0xff]
  %v74 = vld [vmem:[%s1 + $0x1f8] sm:$0xff]
  %v75 = vld [vmem:[%s0] sm:$0xff]
  %v76 = vld [vmem:[%s0 + $0x8] sm:$0xff]
  %p77 = scmp.eq.s32.totalorder 0, 0
  // Predicated region
  $region10: #{multi_crf_nll.1} parent=0 // pred_check
    %p78 = pneg %p77
  $region11: #{multi_crf_nll.1} parent=0 // pred_check_branch
    %80 = sbr.rel (%p78) target = $region13
  $region12: #{multi_crf_nll.1} parent=0 // pred_region
    %81 = vst [vmem:[#allocation2] sm:$0xff] %v75
    %82 = vst [vmem:[#allocation2 + $0x8] sm:$0xff] %v76
  $region13: #{multi_crf_nll.1} parent=0 // pred_fallthru
    _
  %p83 = scmp.ne.s32.totalorder 0, 0
  // Predicated region
  $region14: #{multi_crf_nll.1} parent=0 // pred_check
    %p84 = pneg %p83
  $region15: #{multi_crf_nll.1} parent=0 // pred_check_branch
    %86 = sbr.rel (%p84) target = $region17
  $region16: #{multi_crf_nll.1} parent=0 // pred_region
    %v87 = vld [vmem:[#allocation2] sm:$0xff]
    %v88 = vld [vmem:[#allocation2 + $0x8] sm:$0xff]
    %89 = vmax.xlane.f32.xlu0 %v87
    %v90 = vpop.xlane.xlu0 %89
    %v91 = vsub.f32 %v87, %v90
    %v92 = vmul.f32 %v91, 1.442695
    %v93 = vpow.pop %v92
    %94 = vmax.xlane.f32.xlu0 %v88
    %v95 = vpop.xlane.xlu0 %94
    %v96 = vsub.f32 %v88, %v95
    %v97 = vmul.f32 %v96, 1.442695
    %v98 = vpow.pop %v97
    %99 = vmatpush.msra.mxu0 %v41
    %100 = vmatpush.msra.mxu0 %v39
    %101 = vmatpush.msra.mxu0 %v37
    %102 = vmatpush.msra.mxu0 %v35
    %103 = vmatpush.msra.mxu0 %v33
    %104 = vmatpush.msra.mxu0 %v31
    %105 = vmatpush.msra.mxu0 %v29
    %106 = vmatpush.msra.mxu0 %v27
    %107 = vmatpush.msra.mxu0 %v25
    %108 = vmatpush.msra.mxu0 %v23
    %109 = vmatpush.msra.mxu0 %v21
    %110 = vmatpush.msra.mxu0 %v19
    %111 = vmatpush.msra.mxu0 %v17
    %112 = vmatpush.msra.mxu0 %v15
    %113 = vmatpush.msra.mxu0 %v13
    %114 = vmatpush.msra.mxu0 %v11
    %115 = vmatmul.f32.gmra.mxu0 %v93
    %v116 = vpop.f32.mrf.mxu0
    %v117 = vadd.f32 0.0, %v116
    %118 = vdwg.mxu0
    %119 = vmatpush.msra.mxu0 %v73
    %120 = vmatpush.msra.mxu0 %v71
    %121 = vmatpush.msra.mxu0 %v69
    %122 = vmatpush.msra.mxu0 %v67
    %123 = vmatpush.msra.mxu0 %v65
    %124 = vmatpush.msra.mxu0 %v63
    %125 = vmatpush.msra.mxu0 %v61
    %126 = vmatpush.msra.mxu0 %v59
    %127 = vmatpush.msra.mxu0 %v57
    %128 = vmatpush.msra.mxu0 %v55
    %129 = vmatpush.msra.mxu0 %v53
    %130 = vmatpush.msra.mxu0 %v51
    %131 = vmatpush.msra.mxu0 %v49
    %132 = vmatpush.msra.mxu0 %v47
    %133 = vmatpush.msra.mxu0 %v45
    %134 = vmatpush.msra.mxu0 %v43
    %135 = vmatmul.f32.gmra.mxu0 %v98
    %v136 = vpop.f32.mrf.mxu0
    %v137 = vadd.f32 %v117, %v136
    %138 = vdwg.mxu0
    %139 = vmatpush.msra.mxu0 %v42
    %140 = vmatpush.msra.mxu0 %v40
    %141 = vmatpush.msra.mxu0 %v38
    %142 = vmatpush.msra.mxu0 %v36
    %143 = vmatpush.msra.mxu0 %v34
    %144 = vmatpush.msra.mxu0 %v32
    %145 = vmatpush.msra.mxu0 %v30
    %146 = vmatpush.msra.mxu0 %v28
    %147 = vmatpush.msra.mxu0 %v26
    %148 = vmatpush.msra.mxu0 %v24
    %149 = vmatpush.msra.mxu0 %v22
    %150 = vmatpush.msra.mxu0 %v20
    %151 = vmatpush.msra.mxu0 %v18
    %152 = vmatpush.msra.mxu0 %v16
    %153 = vmatpush.msra.mxu0 %v14
    %154 = vmatpush.msra.mxu0 %v12
    %155 = vmatmul.f32.gmra.mxu0 %v93
    %v156 = vpop.f32.mrf.mxu0
    %v157 = vadd.f32 0.0, %v156
    %158 = vdwg.mxu0
    %159 = vmatpush.msra.mxu0 %v74
    %160 = vmatpush.msra.mxu0 %v72
    %161 = vmatpush.msra.mxu0 %v70
    %162 = vmatpush.msra.mxu0 %v68
    %163 = vmatpush.msra.mxu0 %v66
    %164 = vmatpush.msra.mxu0 %v64
    %165 = vmatpush.msra.mxu0 %v62
    %166 = vmatpush.msra.mxu0 %v60
    %167 = vmatpush.msra.mxu0 %v58
    %168 = vmatpush.msra.mxu0 %v56
    %169 = vmatpush.msra.mxu0 %v54
    %170 = vmatpush.msra.mxu0 %v52
    %171 = vmatpush.msra.mxu0 %v50
    %172 = vmatpush.msra.mxu0 %v48
    %173 = vmatpush.msra.mxu0 %v46
    %174 = vmatpush.msra.mxu0 %v44
    %175 = vmatmul.f32.gmra.mxu0 %v98
    %v176 = vpop.f32.mrf.mxu0
    %v177 = vadd.f32 %v157, %v176
    %178 = vdwg.mxu0
    %v179 = vmax.f32 %v137, 1e-30
    %v180 = vlog2.pop %v179
    %v181 = vmul.f32 %v180, 0.6931472
    %v182 = vadd.f32 %v181, %v90
    %v183 = vmax.f32 %v177, 1e-30
    %v184 = vlog2.pop %v183
    %v185 = vmul.f32 %v184, 0.6931472
    %v186 = vadd.f32 %v185, %v95
    %v187 = vadd.f32 %v182, %v75
    %v188 = vadd.f32 %v186, %v76
    %189 = vst [vmem:[#allocation2] sm:$0xff] %v187
    %190 = vst [vmem:[#allocation2 + $0x8] sm:$0xff] %v188
  $region17: #{multi_crf_nll.1} parent=0 // pred_fallthru
    _
  %v191 = vld [vmem:[#allocation2] sm:$0xff]
  %v192 = vld [vmem:[#allocation2 + $0x8] sm:$0xff]
  %s193 = scalar_lea.vmem %s0, 16
  %v194 = vld [vmem:[%s193] sm:$0xff]
  %v195 = vld [vmem:[%s193 + $0x8] sm:$0xff]
  %196 = vmax.xlane.f32.xlu0 %v191
  %v197 = vpop.xlane.xlu0 %196
  %v198 = vsub.f32 %v191, %v197
  %v199 = vmul.f32 %v198, 1.442695
  %v200 = vpow.pop %v199
  %201 = vmax.xlane.f32.xlu0 %v192
  %v202 = vpop.xlane.xlu0 %201
  %v203 = vsub.f32 %v192, %v202
  %v204 = vmul.f32 %v203, 1.442695
  %v205 = vpow.pop %v204
  %206 = vmatpush.msra.mxu0 %v41
  %207 = vmatpush.msra.mxu0 %v39
  %208 = vmatpush.msra.mxu0 %v37
  %209 = vmatpush.msra.mxu0 %v35
  %210 = vmatpush.msra.mxu0 %v33
  %211 = vmatpush.msra.mxu0 %v31
  %212 = vmatpush.msra.mxu0 %v29
  %213 = vmatpush.msra.mxu0 %v27
  %214 = vmatpush.msra.mxu0 %v25
  %215 = vmatpush.msra.mxu0 %v23
  %216 = vmatpush.msra.mxu0 %v21
  %217 = vmatpush.msra.mxu0 %v19
  %218 = vmatpush.msra.mxu0 %v17
  %219 = vmatpush.msra.mxu0 %v15
  %220 = vmatpush.msra.mxu0 %v13
  %221 = vmatpush.msra.mxu0 %v11
  %222 = vmatmul.f32.gmra.mxu0 %v200
  %v223 = vpop.f32.mrf.mxu0
  %v224 = vadd.f32 0.0, %v223
  %225 = vdwg.mxu0
  %226 = vmatpush.msra.mxu0 %v73
  %227 = vmatpush.msra.mxu0 %v71
  %228 = vmatpush.msra.mxu0 %v69
  %229 = vmatpush.msra.mxu0 %v67
  %230 = vmatpush.msra.mxu0 %v65
  %231 = vmatpush.msra.mxu0 %v63
  %232 = vmatpush.msra.mxu0 %v61
  %233 = vmatpush.msra.mxu0 %v59
  %234 = vmatpush.msra.mxu0 %v57
  %235 = vmatpush.msra.mxu0 %v55
  %236 = vmatpush.msra.mxu0 %v53
  %237 = vmatpush.msra.mxu0 %v51
  %238 = vmatpush.msra.mxu0 %v49
  %239 = vmatpush.msra.mxu0 %v47
  %240 = vmatpush.msra.mxu0 %v45
  %241 = vmatpush.msra.mxu0 %v43
  %242 = vmatmul.f32.gmra.mxu0 %v205
  %v243 = vpop.f32.mrf.mxu0
  %v244 = vadd.f32 %v224, %v243
  %245 = vdwg.mxu0
  %246 = vmatpush.msra.mxu0 %v42
  %247 = vmatpush.msra.mxu0 %v40
  %248 = vmatpush.msra.mxu0 %v38
  %249 = vmatpush.msra.mxu0 %v36
  %250 = vmatpush.msra.mxu0 %v34
  %251 = vmatpush.msra.mxu0 %v32
  %252 = vmatpush.msra.mxu0 %v30
  %253 = vmatpush.msra.mxu0 %v28
  %254 = vmatpush.msra.mxu0 %v26
  %255 = vmatpush.msra.mxu0 %v24
  %256 = vmatpush.msra.mxu0 %v22
  %257 = vmatpush.msra.mxu0 %v20
  %258 = vmatpush.msra.mxu0 %v18
  %259 = vmatpush.msra.mxu0 %v16
  %260 = vmatpush.msra.mxu0 %v14
  %261 = vmatpush.msra.mxu0 %v12
  %262 = vmatmul.f32.gmra.mxu0 %v200
  %v263 = vpop.f32.mrf.mxu0
  %v264 = vadd.f32 0.0, %v263
  %265 = vdwg.mxu0
  %266 = vmatpush.msra.mxu0 %v74
  %267 = vmatpush.msra.mxu0 %v72
  %268 = vmatpush.msra.mxu0 %v70
  %269 = vmatpush.msra.mxu0 %v68
  %270 = vmatpush.msra.mxu0 %v66
  %271 = vmatpush.msra.mxu0 %v64
  %272 = vmatpush.msra.mxu0 %v62
  %273 = vmatpush.msra.mxu0 %v60
  %274 = vmatpush.msra.mxu0 %v58
  %275 = vmatpush.msra.mxu0 %v56
  %276 = vmatpush.msra.mxu0 %v54
  %277 = vmatpush.msra.mxu0 %v52
  %278 = vmatpush.msra.mxu0 %v50
  %279 = vmatpush.msra.mxu0 %v48
  %280 = vmatpush.msra.mxu0 %v46
  %281 = vmatpush.msra.mxu0 %v44
  %282 = vmatmul.f32.gmra.mxu0 %v205
  %v283 = vpop.f32.mrf.mxu0
  %v284 = vadd.f32 %v264, %v283
  %285 = vdwg.mxu0
  %v286 = vmax.f32 %v244, 1e-30
  %v287 = vlog2.pop %v286
  %v288 = vmul.f32 %v287, 0.6931472
  %v289 = vadd.f32 %v288, %v197
  %v290 = vmax.f32 %v284, 1e-30
  %v291 = vlog2.pop %v290
  %v292 = vmul.f32 %v291, 0.6931472
  %v293 = vadd.f32 %v292, %v202
  %v294 = vadd.f32 %v289, %v194
  %v295 = vadd.f32 %v293, %v195
  %s296 = scalar_lea.vmem %s0, 32
  %v297 = vld [vmem:[%s296] sm:$0xff]
  %v298 = vld [vmem:[%s296 + $0x8] sm:$0xff]
  %299 = vmax.xlane.f32.xlu0 %v294
  %v300 = vpop.xlane.xlu0 %299
  %v301 = vsub.f32 %v294, %v300
  %v302 = vmul.f32 %v301, 1.442695
  %v303 = vpow.pop %v302
  %304 = vmax.xlane.f32.xlu0 %v295
  %v305 = vpop.xlane.xlu0 %304
  %v306 = vsub.f32 %v295, %v305
  %v307 = vmul.f32 %v306, 1.442695
  %v308 = vpow.pop %v307
  %309 = vmatpush.msra.mxu0 %v41
  %310 = vmatpush.msra.mxu0 %v39
  %311 = vmatpush.msra.mxu0 %v37
  %312 = vmatpush.msra.mxu0 %v35
  %313 = vmatpush.msra.mxu0 %v33
  %314 = vmatpush.msra.mxu0 %v31
  %315 = vmatpush.msra.mxu0 %v29
  %316 = vmatpush.msra.mxu0 %v27
  %317 = vmatpush.msra.mxu0 %v25
  %318 = vmatpush.msra.mxu0 %v23
  %319 = vmatpush.msra.mxu0 %v21
  %320 = vmatpush.msra.mxu0 %v19
  %321 = vmatpush.msra.mxu0 %v17
  %322 = vmatpush.msra.mxu0 %v15
  %323 = vmatpush.msra.mxu0 %v13
  %324 = vmatpush.msra.mxu0 %v11
  %325 = vmatmul.f32.gmra.mxu0 %v303
  %v326 = vpop.f32.mrf.mxu0
  %v327 = vadd.f32 0.0, %v326
  %328 = vdwg.mxu0
  %329 = vmatpush.msra.mxu0 %v73
  %330 = vmatpush.msra.mxu0 %v71
  %331 = vmatpush.msra.mxu0 %v69
  %332 = vmatpush.msra.mxu0 %v67
  %333 = vmatpush.msra.mxu0 %v65
  %334 = vmatpush.msra.mxu0 %v63
  %335 = vmatpush.msra.mxu0 %v61
  %336 = vmatpush.msra.mxu0 %v59
  %337 = vmatpush.msra.mxu0 %v57
  %338 = vmatpush.msra.mxu0 %v55
  %339 = vmatpush.msra.mxu0 %v53
  %340 = vmatpush.msra.mxu0 %v51
  %341 = vmatpush.msra.mxu0 %v49
  %342 = vmatpush.msra.mxu0 %v47
  %343 = vmatpush.msra.mxu0 %v45
  %344 = vmatpush.msra.mxu0 %v43
  %345 = vmatmul.f32.gmra.mxu0 %v308
  %v346 = vpop.f32.mrf.mxu0
  %v347 = vadd.f32 %v327, %v346
  %348 = vdwg.mxu0
  %349 = vmatpush.msra.mxu0 %v42
  %350 = vmatpush.msra.mxu0 %v40
  %351 = vmatpush.msra.mxu0 %v38
  %352 = vmatpush.msra.mxu0 %v36
  %353 = vmatpush.msra.mxu0 %v34
  %354 = vmatpush.msra.mxu0 %v32
  %355 = vmatpush.msra.mxu0 %v30
  %356 = vmatpush.msra.mxu0 %v28
  %357 = vmatpush.msra.mxu0 %v26
  %358 = vmatpush.msra.mxu0 %v24
  %359 = vmatpush.msra.mxu0 %v22
  %360 = vmatpush.msra.mxu0 %v20
  %361 = vmatpush.msra.mxu0 %v18
  %362 = vmatpush.msra.mxu0 %v16
  %363 = vmatpush.msra.mxu0 %v14
  %364 = vmatpush.msra.mxu0 %v12
  %365 = vmatmul.f32.gmra.mxu0 %v303
  %v366 = vpop.f32.mrf.mxu0
  %v367 = vadd.f32 0.0, %v366
  %368 = vdwg.mxu0
  %369 = vmatpush.msra.mxu0 %v74
  %370 = vmatpush.msra.mxu0 %v72
  %371 = vmatpush.msra.mxu0 %v70
  %372 = vmatpush.msra.mxu0 %v68
  %373 = vmatpush.msra.mxu0 %v66
  %374 = vmatpush.msra.mxu0 %v64
  %375 = vmatpush.msra.mxu0 %v62
  %376 = vmatpush.msra.mxu0 %v60
  %377 = vmatpush.msra.mxu0 %v58
  %378 = vmatpush.msra.mxu0 %v56
  %379 = vmatpush.msra.mxu0 %v54
  %380 = vmatpush.msra.mxu0 %v52
  %381 = vmatpush.msra.mxu0 %v50
  %382 = vmatpush.msra.mxu0 %v48
  %383 = vmatpush.msra.mxu0 %v46
  %384 = vmatpush.msra.mxu0 %v44
  %385 = vmatmul.f32.gmra.mxu0 %v308
  %v386 = vpop.f32.mrf.mxu0
  %v387 = vadd.f32 %v367, %v386
  %388 = vdwg.mxu0
  %v389 = vmax.f32 %v347, 1e-30
  %v390 = vlog2.pop %v389
  %v391 = vmul.f32 %v390, 0.6931472
  %v392 = vadd.f32 %v391, %v300
  %v393 = vmax.f32 %v387, 1e-30
  %v394 = vlog2.pop %v393
  %v395 = vmul.f32 %v394, 0.6931472
  %v396 = vadd.f32 %v395, %v305
  %v397 = vadd.f32 %v392, %v297
  %v398 = vadd.f32 %v396, %v298
  %s399 = scalar_lea.vmem %s0, 48
  %v400 = vld [vmem:[%s399] sm:$0xff]
  %v401 = vld [vmem:[%s399 + $0x8] sm:$0xff]
  %402 = vmax.xlane.f32.xlu0 %v397
  %v403 = vpop.xlane.xlu0 %402
  %v404 = vsub.f32 %v397, %v403
  %v405 = vmul.f32 %v404, 1.442695
  %v406 = vpow.pop %v405
  %407 = vmax.xlane.f32.xlu0 %v398
  %v408 = vpop.xlane.xlu0 %407
  %v409 = vsub.f32 %v398, %v408
  %v410 = vmul.f32 %v409, 1.442695
  %v411 = vpow.pop %v410
  %412 = vmatpush.msra.mxu0 %v41
  %413 = vmatpush.msra.mxu0 %v39
  %414 = vmatpush.msra.mxu0 %v37
  %415 = vmatpush.msra.mxu0 %v35
  %416 = vmatpush.msra.mxu0 %v33
  %417 = vmatpush.msra.mxu0 %v31
  %418 = vmatpush.msra.mxu0 %v29
  %419 = vmatpush.msra.mxu0 %v27
  %420 = vmatpush.msra.mxu0 %v25
  %421 = vmatpush.msra.mxu0 %v23
  %422 = vmatpush.msra.mxu0 %v21
  %423 = vmatpush.msra.mxu0 %v19
  %424 = vmatpush.msra.mxu0 %v17
  %425 = vmatpush.msra.mxu0 %v15
  %426 = vmatpush.msra.mxu0 %v13
  %427 = vmatpush.msra.mxu0 %v11
  %428 = vmatmul.f32.gmra.mxu0 %v406
  %v429 = vpop.f32.mrf.mxu0
  %v430 = vadd.f32 0.0, %v429
  %431 = vdwg.mxu0
  %432 = vmatpush.msra.mxu0 %v73
  %433 = vmatpush.msra.mxu0 %v71
  %434 = vmatpush.msra.mxu0 %v69
  %435 = vmatpush.msra.mxu0 %v67
  %436 = vmatpush.msra.mxu0 %v65
  %437 = vmatpush.msra.mxu0 %v63
  %438 = vmatpush.msra.mxu0 %v61
  %439 = vmatpush.msra.mxu0 %v59
  %440 = vmatpush.msra.mxu0 %v57
  %441 = vmatpush.msra.mxu0 %v55
  %442 = vmatpush.msra.mxu0 %v53
  %443 = vmatpush.msra.mxu0 %v51
  %444 = vmatpush.msra.mxu0 %v49
  %445 = vmatpush.msra.mxu0 %v47
  %446 = vmatpush.msra.mxu0 %v45
  %447 = vmatpush.msra.mxu0 %v43
  %448 = vmatmul.f32.gmra.mxu0 %v411
  %v449 = vpop.f32.mrf.mxu0
  %v450 = vadd.f32 %v430, %v449
  %451 = vdwg.mxu0
  %452 = vmatpush.msra.mxu0 %v42
  %453 = vmatpush.msra.mxu0 %v40
  %454 = vmatpush.msra.mxu0 %v38
  %455 = vmatpush.msra.mxu0 %v36
  %456 = vmatpush.msra.mxu0 %v34
  %457 = vmatpush.msra.mxu0 %v32
  %458 = vmatpush.msra.mxu0 %v30
  %459 = vmatpush.msra.mxu0 %v28
  %460 = vmatpush.msra.mxu0 %v26
  %461 = vmatpush.msra.mxu0 %v24
  %462 = vmatpush.msra.mxu0 %v22
  %463 = vmatpush.msra.mxu0 %v20
  %464 = vmatpush.msra.mxu0 %v18
  %465 = vmatpush.msra.mxu0 %v16
  %466 = vmatpush.msra.mxu0 %v14
  %467 = vmatpush.msra.mxu0 %v12
  %468 = vmatmul.f32.gmra.mxu0 %v406
  %v469 = vpop.f32.mrf.mxu0
  %v470 = vadd.f32 0.0, %v469
  %471 = vdwg.mxu0
  %472 = vmatpush.msra.mxu0 %v74
  %473 = vmatpush.msra.mxu0 %v72
  %474 = vmatpush.msra.mxu0 %v70
  %475 = vmatpush.msra.mxu0 %v68
  %476 = vmatpush.msra.mxu0 %v66
  %477 = vmatpush.msra.mxu0 %v64
  %478 = vmatpush.msra.mxu0 %v62
  %479 = vmatpush.msra.mxu0 %v60
  %480 = vmatpush.msra.mxu0 %v58
  %481 = vmatpush.msra.mxu0 %v56
  %482 = vmatpush.msra.mxu0 %v54
  %483 = vmatpush.msra.mxu0 %v52
  %484 = vmatpush.msra.mxu0 %v50
  %485 = vmatpush.msra.mxu0 %v48
  %486 = vmatpush.msra.mxu0 %v46
  %487 = vmatpush.msra.mxu0 %v44
  %488 = vmatmul.f32.gmra.mxu0 %v411
  %v489 = vpop.f32.mrf.mxu0
  %v490 = vadd.f32 %v470, %v489
  %491 = vdwg.mxu0
  %v492 = vmax.f32 %v450, 1e-30
  %v493 = vlog2.pop %v492
  %v494 = vmul.f32 %v493, 0.6931472
  %v495 = vadd.f32 %v494, %v403
  %v496 = vmax.f32 %v490, 1e-30
  %v497 = vlog2.pop %v496
  %v498 = vmul.f32 %v497, 0.6931472
  %v499 = vadd.f32 %v498, %v408
  %v500 = vadd.f32 %v495, %v400
  %v501 = vadd.f32 %v499, %v401
  %s502 = scalar_lea.vmem %s0, 64
  %v503 = vld [vmem:[%s502] sm:$0xff]
  %v504 = vld [vmem:[%s502 + $0x8] sm:$0xff]
  %505 = vmax.xlane.f32.xlu0 %v500
  %v506 = vpop.xlane.xlu0 %505
  %v507 = vsub.f32 %v500, %v506
  %v508 = vmul.f32 %v507, 1.442695
  %v509 = vpow.pop %v508
  %510 = vmax.xlane.f32.xlu0 %v501
  %v511 = vpop.xlane.xlu0 %510
  %v512 = vsub.f32 %v501, %v511
  %v513 = vmul.f32 %v512, 1.442695
  %v514 = vpow.pop %v513
  %515 = vmatpush.msra.mxu0 %v41
  %516 = vmatpush.msra.mxu0 %v39
  %517 = vmatpush.msra.mxu0 %v37
  %518 = vmatpush.msra.mxu0 %v35
  %519 = vmatpush.msra.mxu0 %v33
  %520 = vmatpush.msra.mxu0 %v31
  %521 = vmatpush.msra.mxu0 %v29
  %522 = vmatpush.msra.mxu0 %v27
  %523 = vmatpush.msra.mxu0 %v25
  %524 = vmatpush.msra.mxu0 %v23
  %525 = vmatpush.msra.mxu0 %v21
  %526 = vmatpush.msra.mxu0 %v19
  %527 = vmatpush.msra.mxu0 %v17
  %528 = vmatpush.msra.mxu0 %v15
  %529 = vmatpush.msra.mxu0 %v13
  %530 = vmatpush.msra.mxu0 %v11
  %531 = vmatmul.f32.gmra.mxu0 %v509
  %v532 = vpop.f32.mrf.mxu0
  %v533 = vadd.f32 0.0, %v532
  %534 = vdwg.mxu0
  %535 = vmatpush.msra.mxu0 %v73
  %536 = vmatpush.msra.mxu0 %v71
  %537 = vmatpush.msra.mxu0 %v69
  %538 = vmatpush.msra.mxu0 %v67
  %539 = vmatpush.msra.mxu0 %v65
  %540 = vmatpush.msra.mxu0 %v63
  %541 = vmatpush.msra.mxu0 %v61
  %542 = vmatpush.msra.mxu0 %v59
  %543 = vmatpush.msra.mxu0 %v57
  %544 = vmatpush.msra.mxu0 %v55
  %545 = vmatpush.msra.mxu0 %v53
  %546 = vmatpush.msra.mxu0 %v51
  %547 = vmatpush.msra.mxu0 %v49
  %548 = vmatpush.msra.mxu0 %v47
  %549 = vmatpush.msra.mxu0 %v45
  %550 = vmatpush.msra.mxu0 %v43
  %551 = vmatmul.f32.gmra.mxu0 %v514
  %v552 = vpop.f32.mrf.mxu0
  %v553 = vadd.f32 %v533, %v552
  %554 = vdwg.mxu0
  %555 = vmatpush.msra.mxu0 %v42
  %556 = vmatpush.msra.mxu0 %v40
  %557 = vmatpush.msra.mxu0 %v38
  %558 = vmatpush.msra.mxu0 %v36
  %559 = vmatpush.msra.mxu0 %v34
  %560 = vmatpush.msra.mxu0 %v32
  %561 = vmatpush.msra.mxu0 %v30
  %562 = vmatpush.msra.mxu0 %v28
  %563 = vmatpush.msra.mxu0 %v26
  %564 = vmatpush.msra.mxu0 %v24
  %565 = vmatpush.msra.mxu0 %v22
  %566 = vmatpush.msra.mxu0 %v20
  %567 = vmatpush.msra.mxu0 %v18
  %568 = vmatpush.msra.mxu0 %v16
  %569 = vmatpush.msra.mxu0 %v14
  %570 = vmatpush.msra.mxu0 %v12
  %571 = vmatmul.f32.gmra.mxu0 %v509
  %v572 = vpop.f32.mrf.mxu0
  %v573 = vadd.f32 0.0, %v572
  %574 = vdwg.mxu0
  %575 = vmatpush.msra.mxu0 %v74
  %576 = vmatpush.msra.mxu0 %v72
  %577 = vmatpush.msra.mxu0 %v70
  %578 = vmatpush.msra.mxu0 %v68
  %579 = vmatpush.msra.mxu0 %v66
  %580 = vmatpush.msra.mxu0 %v64
  %581 = vmatpush.msra.mxu0 %v62
  %582 = vmatpush.msra.mxu0 %v60
  %583 = vmatpush.msra.mxu0 %v58
  %584 = vmatpush.msra.mxu0 %v56
  %585 = vmatpush.msra.mxu0 %v54
  %586 = vmatpush.msra.mxu0 %v52
  %587 = vmatpush.msra.mxu0 %v50
  %588 = vmatpush.msra.mxu0 %v48
  %589 = vmatpush.msra.mxu0 %v46
  %590 = vmatpush.msra.mxu0 %v44
  %591 = vmatmul.f32.gmra.mxu0 %v514
  %v592 = vpop.f32.mrf.mxu0
  %v593 = vadd.f32 %v573, %v592
  %594 = vdwg.mxu0
  %v595 = vmax.f32 %v553, 1e-30
  %v596 = vlog2.pop %v595
  %v597 = vmul.f32 %v596, 0.6931472
  %v598 = vadd.f32 %v597, %v506
  %v599 = vmax.f32 %v593, 1e-30
  %v600 = vlog2.pop %v599
  %v601 = vmul.f32 %v600, 0.6931472
  %v602 = vadd.f32 %v601, %v511
  %v603 = vadd.f32 %v598, %v503
  %v604 = vadd.f32 %v602, %v504
  %s605 = scalar_lea.vmem %s0, 80
  %v606 = vld [vmem:[%s605] sm:$0xff]
  %v607 = vld [vmem:[%s605 + $0x8] sm:$0xff]
  %608 = vmax.xlane.f32.xlu0 %v603
  %v609 = vpop.xlane.xlu0 %608
  %v610 = vsub.f32 %v603, %v609
  %v611 = vmul.f32 %v610, 1.442695
  %v612 = vpow.pop %v611
  %613 = vmax.xlane.f32.xlu0 %v604
  %v614 = vpop.xlane.xlu0 %613
  %v615 = vsub.f32 %v604, %v614
  %v616 = vmul.f32 %v615, 1.442695
  %v617 = vpow.pop %v616
  %618 = vmatpush.msra.mxu0 %v41
  %619 = vmatpush.msra.mxu0 %v39
  %620 = vmatpush.msra.mxu0 %v37
  %621 = vmatpush.msra.mxu0 %v35
  %622 = vmatpush.msra.mxu0 %v33
  %623 = vmatpush.msra.mxu0 %v31
  %624 = vmatpush.msra.mxu0 %v29
  %625 = vmatpush.msra.mxu0 %v27
  %626 = vmatpush.msra.mxu0 %v25
  %627 = vmatpush.msra.mxu0 %v23
  %628 = vmatpush.msra.mxu0 %v21
  %629 = vmatpush.msra.mxu0 %v19
  %630 = vmatpush.msra.mxu0 %v17
  %631 = vmatpush.msra.mxu0 %v15
  %632 = vmatpush.msra.mxu0 %v13
  %633 = vmatpush.msra.mxu0 %v11
  %634 = vmatmul.f32.gmra.mxu0 %v612
  %v635 = vpop.f32.mrf.mxu0
  %v636 = vadd.f32 0.0, %v635
  %637 = vdwg.mxu0
  %638 = vmatpush.msra.mxu0 %v73
  %639 = vmatpush.msra.mxu0 %v71
  %640 = vmatpush.msra.mxu0 %v69
  %641 = vmatpush.msra.mxu0 %v67
  %642 = vmatpush.msra.mxu0 %v65
  %643 = vmatpush.msra.mxu0 %v63
  %644 = vmatpush.msra.mxu0 %v61
  %645 = vmatpush.msra.mxu0 %v59
  %646 = vmatpush.msra.mxu0 %v57
  %647 = vmatpush.msra.mxu0 %v55
  %648 = vmatpush.msra.mxu0 %v53
  %649 = vmatpush.msra.mxu0 %v51
  %650 = vmatpush.msra.mxu0 %v49
  %651 = vmatpush.msra.mxu0 %v47
  %652 = vmatpush.msra.mxu0 %v45
  %653 = vmatpush.msra.mxu0 %v43
  %654 = vmatmul.f32.gmra.mxu0 %v617
  %v655 = vpop.f32.mrf.mxu0
  %v656 = vadd.f32 %v636, %v655
  %657 = vdwg.mxu0
  %658 = vmatpush.msra.mxu0 %v42
  %659 = vmatpush.msra.mxu0 %v40
  %660 = vmatpush.msra.mxu0 %v38
  %661 = vmatpush.msra.mxu0 %v36
  %662 = vmatpush.msra.mxu0 %v34
  %663 = vmatpush.msra.mxu0 %v32
  %664 = vmatpush.msra.mxu0 %v30
  %665 = vmatpush.msra.mxu0 %v28
  %666 = vmatpush.msra.mxu0 %v26
  %667 = vmatpush.msra.mxu0 %v24
  %668 = vmatpush.msra.mxu0 %v22
  %669 = vmatpush.msra.mxu0 %v20
  %670 = vmatpush.msra.mxu0 %v18
  %671 = vmatpush.msra.mxu0 %v16
  %672 = vmatpush.msra.mxu0 %v14
  %673 = vmatpush.msra.mxu0 %v12
  %674 = vmatmul.f32.gmra.mxu0 %v612
  %v675 = vpop.f32.mrf.mxu0
  %v676 = vadd.f32 0.0, %v675
  %677 = vdwg.mxu0
  %678 = vmatpush.msra.mxu0 %v74
  %679 = vmatpush.msra.mxu0 %v72
  %680 = vmatpush.msra.mxu0 %v70
  %681 = vmatpush.msra.mxu0 %v68
  %682 = vmatpush.msra.mxu0 %v66
  %683 = vmatpush.msra.mxu0 %v64
  %684 = vmatpush.msra.mxu0 %v62
  %685 = vmatpush.msra.mxu0 %v60
  %686 = vmatpush.msra.mxu0 %v58
  %687 = vmatpush.msra.mxu0 %v56
  %688 = vmatpush.msra.mxu0 %v54
  %689 = vmatpush.msra.mxu0 %v52
  %690 = vmatpush.msra.mxu0 %v50
  %691 = vmatpush.msra.mxu0 %v48
  %692 = vmatpush.msra.mxu0 %v46
  %693 = vmatpush.msra.mxu0 %v44
  %694 = vmatmul.f32.gmra.mxu0 %v617
  %v695 = vpop.f32.mrf.mxu0
  %v696 = vadd.f32 %v676, %v695
  %697 = vdwg.mxu0
  %v698 = vmax.f32 %v656, 1e-30
  %v699 = vlog2.pop %v698
  %v700 = vmul.f32 %v699, 0.6931472
  %v701 = vadd.f32 %v700, %v609
  %v702 = vmax.f32 %v696, 1e-30
  %v703 = vlog2.pop %v702
  %v704 = vmul.f32 %v703, 0.6931472
  %v705 = vadd.f32 %v704, %v614
  %v706 = vadd.f32 %v701, %v606
  %v707 = vadd.f32 %v705, %v607
  %s708 = scalar_lea.vmem %s0, 96
  %v709 = vld [vmem:[%s708] sm:$0xff]
  %v710 = vld [vmem:[%s708 + $0x8] sm:$0xff]
  %711 = vmax.xlane.f32.xlu0 %v706
  %v712 = vpop.xlane.xlu0 %711
  %v713 = vsub.f32 %v706, %v712
  %v714 = vmul.f32 %v713, 1.442695
  %v715 = vpow.pop %v714
  %716 = vmax.xlane.f32.xlu0 %v707
  %v717 = vpop.xlane.xlu0 %716
  %v718 = vsub.f32 %v707, %v717
  %v719 = vmul.f32 %v718, 1.442695
  %v720 = vpow.pop %v719
  %721 = vmatpush.msra.mxu0 %v41
  %722 = vmatpush.msra.mxu0 %v39
  %723 = vmatpush.msra.mxu0 %v37
  %724 = vmatpush.msra.mxu0 %v35
  %725 = vmatpush.msra.mxu0 %v33
  %726 = vmatpush.msra.mxu0 %v31
  %727 = vmatpush.msra.mxu0 %v29
  %728 = vmatpush.msra.mxu0 %v27
  %729 = vmatpush.msra.mxu0 %v25
  %730 = vmatpush.msra.mxu0 %v23
  %731 = vmatpush.msra.mxu0 %v21
  %732 = vmatpush.msra.mxu0 %v19
  %733 = vmatpush.msra.mxu0 %v17
  %734 = vmatpush.msra.mxu0 %v15
  %735 = vmatpush.msra.mxu0 %v13
  %736 = vmatpush.msra.mxu0 %v11
  %737 = vmatmul.f32.gmra.mxu0 %v715
  %v738 = vpop.f32.mrf.mxu0
  %v739 = vadd.f32 0.0, %v738
  %740 = vdwg.mxu0
  %741 = vmatpush.msra.mxu0 %v73
  %742 = vmatpush.msra.mxu0 %v71
  %743 = vmatpush.msra.mxu0 %v69
  %744 = vmatpush.msra.mxu0 %v67
  %745 = vmatpush.msra.mxu0 %v65
  %746 = vmatpush.msra.mxu0 %v63
  %747 = vmatpush.msra.mxu0 %v61
  %748 = vmatpush.msra.mxu0 %v59
  %749 = vmatpush.msra.mxu0 %v57
  %750 = vmatpush.msra.mxu0 %v55
  %751 = vmatpush.msra.mxu0 %v53
  %752 = vmatpush.msra.mxu0 %v51
  %753 = vmatpush.msra.mxu0 %v49
  %754 = vmatpush.msra.mxu0 %v47
  %755 = vmatpush.msra.mxu0 %v45
  %756 = vmatpush.msra.mxu0 %v43
  %757 = vmatmul.f32.gmra.mxu0 %v720
  %v758 = vpop.f32.mrf.mxu0
  %v759 = vadd.f32 %v739, %v758
  %760 = vdwg.mxu0
  %761 = vmatpush.msra.mxu0 %v42
  %762 = vmatpush.msra.mxu0 %v40
  %763 = vmatpush.msra.mxu0 %v38
  %764 = vmatpush.msra.mxu0 %v36
  %765 = vmatpush.msra.mxu0 %v34
  %766 = vmatpush.msra.mxu0 %v32
  %767 = vmatpush.msra.mxu0 %v30
  %768 = vmatpush.msra.mxu0 %v28
  %769 = vmatpush.msra.mxu0 %v26
  %770 = vmatpush.msra.mxu0 %v24
  %771 = vmatpush.msra.mxu0 %v22
  %772 = vmatpush.msra.mxu0 %v20
  %773 = vmatpush.msra.mxu0 %v18
  %774 = vmatpush.msra.mxu0 %v16
  %775 = vmatpush.msra.mxu0 %v14
  %776 = vmatpush.msra.mxu0 %v12
  %777 = vmatmul.f32.gmra.mxu0 %v715
  %v778 = vpop.f32.mrf.mxu0
  %v779 = vadd.f32 0.0, %v778
  %780 = vdwg.mxu0
  %781 = vmatpush.msra.mxu0 %v74
  %782 = vmatpush.msra.mxu0 %v72
  %783 = vmatpush.msra.mxu0 %v70
  %784 = vmatpush.msra.mxu0 %v68
  %785 = vmatpush.msra.mxu0 %v66
  %786 = vmatpush.msra.mxu0 %v64
  %787 = vmatpush.msra.mxu0 %v62
  %788 = vmatpush.msra.mxu0 %v60
  %789 = vmatpush.msra.mxu0 %v58
  %790 = vmatpush.msra.mxu0 %v56
  %791 = vmatpush.msra.mxu0 %v54
  %792 = vmatpush.msra.mxu0 %v52
  %793 = vmatpush.msra.mxu0 %v50
  %794 = vmatpush.msra.mxu0 %v48
  %795 = vmatpush.msra.mxu0 %v46
  %796 = vmatpush.msra.mxu0 %v44
  %797 = vmatmul.f32.gmra.mxu0 %v720
  %v798 = vpop.f32.mrf.mxu0
  %v799 = vadd.f32 %v779, %v798
  %800 = vdwg.mxu0
  %v801 = vmax.f32 %v759, 1e-30
  %v802 = vlog2.pop %v801
  %v803 = vmul.f32 %v802, 0.6931472
  %v804 = vadd.f32 %v803, %v712
  %v805 = vmax.f32 %v799, 1e-30
  %v806 = vlog2.pop %v805
  %v807 = vmul.f32 %v806, 0.6931472
  %v808 = vadd.f32 %v807, %v717
  %v809 = vadd.f32 %v804, %v709
  %v810 = vadd.f32 %v808, %v710
  %s811 = scalar_lea.vmem %s0, 112
  %v812 = vld [vmem:[%s811] sm:$0xff]
  %v813 = vld [vmem:[%s811 + $0x8] sm:$0xff]
  %814 = vmax.xlane.f32.xlu0 %v809
  %v815 = vpop.xlane.xlu0 %814
  %v816 = vsub.f32 %v809, %v815
  %v817 = vmul.f32 %v816, 1.442695
  %v818 = vpow.pop %v817
  %819 = vmax.xlane.f32.xlu0 %v810
  %v820 = vpop.xlane.xlu0 %819
  %v821 = vsub.f32 %v810, %v820
  %v822 = vmul.f32 %v821, 1.442695
  %v823 = vpow.pop %v822
  %824 = vmatpush.msra.mxu0 %v41
  %825 = vmatpush.msra.mxu0 %v39
  %826 = vmatpush.msra.mxu0 %v37
  %827 = vmatpush.msra.mxu0 %v35
  %828 = vmatpush.msra.mxu0 %v33
  %829 = vmatpush.msra.mxu0 %v31
  %830 = vmatpush.msra.mxu0 %v29
  %831 = vmatpush.msra.mxu0 %v27
  %832 = vmatpush.msra.mxu0 %v25
  %833 = vmatpush.msra.mxu0 %v23
  %834 = vmatpush.msra.mxu0 %v21
  %835 = vmatpush.msra.mxu0 %v19
  %836 = vmatpush.msra.mxu0 %v17
  %837 = vmatpush.msra.mxu0 %v15
  %838 = vmatpush.msra.mxu0 %v13
  %839 = vmatpush.msra.mxu0 %v11
  %840 = vmatmul.f32.gmra.mxu0 %v818
  %v841 = vpop.f32.mrf.mxu0
  %v842 = vadd.f32 0.0, %v841
  %843 = vdwg.mxu0
  %844 = vmatpush.msra.mxu0 %v73
  %845 = vmatpush.msra.mxu0 %v71
  %846 = vmatpush.msra.mxu0 %v69
  %847 = vmatpush.msra.mxu0 %v67
  %848 = vmatpush.msra.mxu0 %v65
  %849 = vmatpush.msra.mxu0 %v63
  %850 = vmatpush.msra.mxu0 %v61
  %851 = vmatpush.msra.mxu0 %v59
  %852 = vmatpush.msra.mxu0 %v57
  %853 = vmatpush.msra.mxu0 %v55
  %854 = vmatpush.msra.mxu0 %v53
  %855 = vmatpush.msra.mxu0 %v51
  %856 = vmatpush.msra.mxu0 %v49
  %857 = vmatpush.msra.mxu0 %v47
  %858 = vmatpush.msra.mxu0 %v45
  %859 = vmatpush.msra.mxu0 %v43
  %860 = vmatmul.f32.gmra.mxu0 %v823
  %v861 = vpop.f32.mrf.mxu0
  %v862 = vadd.f32 %v842, %v861
  %863 = vdwg.mxu0
  %864 = vmatpush.msra.mxu0 %v42
  %865 = vmatpush.msra.mxu0 %v40
  %866 = vmatpush.msra.mxu0 %v38
  %867 = vmatpush.msra.mxu0 %v36
  %868 = vmatpush.msra.mxu0 %v34
  %869 = vmatpush.msra.mxu0 %v32
  %870 = vmatpush.msra.mxu0 %v30
  %871 = vmatpush.msra.mxu0 %v28
  %872 = vmatpush.msra.mxu0 %v26
  %873 = vmatpush.msra.mxu0 %v24
  %874 = vmatpush.msra.mxu0 %v22
  %875 = vmatpush.msra.mxu0 %v20
  %876 = vmatpush.msra.mxu0 %v18
  %877 = vmatpush.msra.mxu0 %v16
  %878 = vmatpush.msra.mxu0 %v14
  %879 = vmatpush.msra.mxu0 %v12
  %880 = vmatmul.f32.gmra.mxu0 %v818
  %v881 = vpop.f32.mrf.mxu0
  %v882 = vadd.f32 0.0, %v881
  %883 = vdwg.mxu0
  %884 = vmatpush.msra.mxu0 %v74
  %885 = vmatpush.msra.mxu0 %v72
  %886 = vmatpush.msra.mxu0 %v70
  %887 = vmatpush.msra.mxu0 %v68
  %888 = vmatpush.msra.mxu0 %v66
  %889 = vmatpush.msra.mxu0 %v64
  %890 = vmatpush.msra.mxu0 %v62
  %891 = vmatpush.msra.mxu0 %v60
  %892 = vmatpush.msra.mxu0 %v58
  %893 = vmatpush.msra.mxu0 %v56
  %894 = vmatpush.msra.mxu0 %v54
  %895 = vmatpush.msra.mxu0 %v52
  %896 = vmatpush.msra.mxu0 %v50
  %897 = vmatpush.msra.mxu0 %v48
  %898 = vmatpush.msra.mxu0 %v46
  %899 = vmatpush.msra.mxu0 %v44
  %900 = vmatmul.f32.gmra.mxu0 %v823
  %v901 = vpop.f32.mrf.mxu0
  %v902 = vadd.f32 %v882, %v901
  %903 = vdwg.mxu0
  %v904 = vmax.f32 %v862, 1e-30
  %v905 = vlog2.pop %v904
  %v906 = vmul.f32 %v905, 0.6931472
  %v907 = vadd.f32 %v906, %v815
  %v908 = vmax.f32 %v902, 1e-30
  %v909 = vlog2.pop %v908
  %v910 = vmul.f32 %v909, 0.6931472
  %v911 = vadd.f32 %v910, %v820
  %v912 = vadd.f32 %v907, %v812
  %v913 = vadd.f32 %v911, %v813
  %914 = vst [vmem:[#allocation2] sm:$0xff] %v912
  %915 = vst [vmem:[#allocation2 + $0x8] sm:$0xff] %v913
  // Predicated region
  $region18: #{multi_crf_nll.1} parent=0 // pred_check
    %p916 = pneg %p77
  $region19: #{multi_crf_nll.1} parent=0 // pred_check_branch
    %918 = sbr.rel (%p916) target = $region21
  $region20: #{multi_crf_nll.1} parent=0 // pred_region
    %v919 = vld [vmem:[#allocation2] sm:$0xff]
    %v920 = vld [vmem:[#allocation2 + $0x8] sm:$0xff]
    %921 = vmax.xlane.f32.xlu0 %v919
    %v922 = vpop.xlane.xlu0 %921
    %v923 = vsub.f32 %v919, %v922
    %v924 = vmul.f32 %v923, 1.442695
    %v925 = vpow.pop %v924
    %926 = vadd.xlane.f32.xlu0 %v925
    %v927 = vpop.xlane.xlu0 %926
    %v928 = vlog2.pop %v927
    %v929 = vmul.f32 %v928, 0.6931472
    %v930 = vadd.f32 %v922, %v929
    %931 = vst [vmem:[%s2] sm:$0xff] %v930
    %932 = vmax.xlane.f32.xlu0 %v920
    %v933 = vpop.xlane.xlu0 %932
    %v934 = vsub.f32 %v920, %v933
    %v935 = vmul.f32 %v934, 1.442695
    %v936 = vpow.pop %v935
    %937 = vadd.xlane.f32.xlu0 %v936
    %v938 = vpop.xlane.xlu0 %937
    %v939 = vlog2.pop %v938
    %v940 = vmul.f32 %v939, 0.6931472
    %v941 = vadd.f32 %v933, %v940
    %s942 = scalar_lea.vmem %s2, 8
    %943 = vst [vmem:[%s942] sm:$0xff] %v941
  $region21: #{multi_crf_nll.1} parent=0 // pred_fallthru
    _
  // Predicated region
  $region22: #{multi_crf_nll.1} parent=0 // pred_check
    _
  $region23: #{multi_crf_nll.1} parent=0 // pred_check_branch
    %945 = sbr.rel (0) target = $region25
  $region24: #{multi_crf_nll.1} parent=0 // pred_region
    _
  $region25: #{multi_crf_nll.1} parent=0 // pred_fallthru
    _
  // Predicated region
  $region26: #{multi_crf_nll.1} parent=0 // pred_check
    _
  $region27: #{multi_crf_nll.1} parent=0 // pred_check_branch
    %947 = sbr.rel (0) target = $region29
  $region28: #{multi_crf_nll.1} parent=0 // pred_region
    _
  $region29: #{multi_crf_nll.1} parent=0 // pred_fallthru
    _

</llo_original>
